<compile_context>
chip_gen: v7x
topology: tpu7x:2x2x1
jax: 0.10.0
libtpu: 0.0.40
codegen_flags: <defaults>
</compile_context>

<pallas_src>
import jax
import jax.numpy as jnp
from jax.experimental import pallas as pl
from jax.experimental.pallas import tpu as pltpu


def _round_up(v, m):
    return (v + m - 1) // m * m


def _make_conv_act_kernel(B_TILE, KH, KW, stride, OH, OW, act_fn, compute_dtype):
    """Fused im2col-conv2d + bias + activation for a block of B_TILE images."""

    def kernel(x_ref, w_ref, b_ref, o_ref):
        # x_ref: (B_TILE, Hp, Wp, C)       padded NHWC input block
        # w_ref: (KH*KW*C, OC_pad)         im2col weight matrix
        # b_ref: (1, OC_pad)               bias (zero in padded lanes)
        # o_ref: (B_TILE, OH, OW, OC_pad)  output block (lane-dense)
        C = x_ref.shape[-1]
        OCp = o_ref.shape[-1]

        # Gather the KH*KW shifted windows and concatenate them on the lane
        # (channel) axis -> a single im2col operand for ONE MXU matmul.
        patches = []
        for kh in range(KH):
            for kw in range(KW):
                if stride == 1:
                    p = x_ref[:, kh:kh + OH, kw:kw + OW, :]
                else:
                    # TODO(synk): stride>1 path (ref-level strided loads) is
                    # untested on hardware for this module; validate before prod.
                    p = x_ref[:, pl.ds(kh, OH, stride=stride),
                              pl.ds(kw, OW, stride=stride), :]
                patches.append(p)
        lhs = jnp.concatenate(patches, axis=-1)            # (B, OH, OW, KH*KW*C)
        lhs = lhs.reshape(B_TILE * OH * OW, KH * KW * C)   # lane dim unchanged

        # Single MXU push: K = KH*KW*C, N = OC_pad (lane-dense), f32 accumulate.
        out = jnp.dot(lhs.astype(compute_dtype),
                      w_ref[...].astype(compute_dtype),
                      preferred_element_type=jnp.float32)
        out = act_fn(out + b_ref[...].astype(jnp.float32))
        o_ref[...] = out.reshape(B_TILE, OH, OW, OCp).astype(o_ref.dtype)

    return kernel


def _pick_batch_tile(N, per_image_block_bytes, vmem_budget_bytes):
    """Largest divisor of N whose double-buffered blocks fit the budget, while
    keeping at least 2 grid steps when N >= 2 so both TensorCores get work."""
    best = 1
    for bt in range(1, N + 1):
        if N % bt:
            continue
        if 2 * bt * per_image_block_bytes > vmem_budget_bytes:
            continue
        if N >= 2 and (N // bt) < 2:
            continue
        best = bt
    return best


def conv2d_activation(x, w, b, *, stride=1, padding=0,
                      padding_mode="zeros", act_fn=None):
    """Fused Conv2d + activation (forward of the PyTorch `Conv2dActivion`).

    x: (N, C, H, W) NCHW input (PyTorch layout)
    w: (OC, C, KH, KW) OIHW weights
    b: (OC,) bias
    Returns (N, OC, OH, OW), matching nn.Conv2d followed by the activation.
    """
    if act_fn is None:
        act_fn = lambda v: jnp.maximum(v, 0.0)        # nn.ReLU (module default)

    N, C, H, W = x.shape
    OC, C_w, KH, KW = w.shape
    assert C == C_w, "channel mismatch"
    s, p = int(stride), int(padding)
    OH = (H + 2 * p - KH) // s + 1
    OW = (W + 2 * p - KW) // s + 1

    # Lane-dense output channels.
    OC_pad = _round_up(OC, 128)

    # MXU operand dtype: bf16 passes for f32 inputs; accumulation stays f32.
    compute_dtype = jnp.bfloat16 if x.dtype == jnp.float32 else x.dtype

    # One-time layout plumbing (fused by XLA): NCHW -> NHWC + halo padding.
    x_nhwc = jnp.transpose(x, (0, 2, 3, 1))
    if p > 0:
        pad_mode = {"zeros": "constant", "reflect": "reflect",
                    "replicate": "edge", "circular": "wrap"}[padding_mode]
        x_nhwc = jnp.pad(x_nhwc, ((0, 0), (p, p), (p, p), (0, 0)), mode=pad_mode)
    Hp, Wp = x_nhwc.shape[1], x_nhwc.shape[2]

    # Weights: OIHW -> (KH, KW, C, OC) -> im2col matrix (KH*KW*C, OC_pad).
    w_r = jnp.transpose(w, (2, 3, 1, 0)).reshape(KH * KW * C, OC)
    w_r = jnp.pad(w_r, ((0, 0), (0, OC_pad - OC)))
    b_r = jnp.pad(b, (0, OC_pad - OC)).reshape(1, OC_pad)

    # Batch blocking: per-image VMEM block footprint (input + output).
    itemsize = jnp.dtype(x.dtype).itemsize
    per_image_bytes = (Hp * Wp * C + OH * OW * OC_pad) * itemsize
    B_TILE = _pick_batch_tile(N, per_image_bytes, vmem_budget_bytes=8 << 20)
    grid = (N // B_TILE,)
    # TODO(synk): for very large images (won't fit v7x's 32 MiB scoped VMEM),
    # add an OH-row tile grid axis with overlapping input row windows.

    # Explicit scoped-VMEM limit: double-buffered in/out blocks + weights.
    w_bytes = KH * KW * C * OC_pad * jnp.dtype(w_r.dtype).itemsize + OC_pad * 4
    vmem_need = 2 * B_TILE * per_image_bytes + 2 * w_bytes + (2 << 20)
    vmem_limit = int(min(max(vmem_need, 16 << 20), 48 << 20))

    kernel = _make_conv_act_kernel(B_TILE, KH, KW, s, OH, OW, act_fn,
                                   compute_dtype)

    cost = pl.CostEstimate(
        flops=2 * N * OH * OW * KH * KW * C * OC_pad,
        transcendentals=0,
        bytes_accessed=int((x_nhwc.size + w_r.size + N * OH * OW * OC_pad)
                           * itemsize))

    out_nhwc = pl.pallas_call(
        kernel,
        out_shape=jax.ShapeDtypeStruct((N, OH, OW, OC_pad), x.dtype),
        grid_spec=pltpu.PrefetchScalarGridSpec(
            num_scalar_prefetch=0,
            grid=grid,                                    # B_TILE images / step
            in_specs=[
                pl.BlockSpec((B_TILE, Hp, Wp, C), lambda n: (n, 0, 0, 0)),
                pl.BlockSpec((KH * KW * C, OC_pad), lambda n: (0, 0)),
                pl.BlockSpec((1, OC_pad), lambda n: (0, 0)),
            ],
            out_specs=pl.BlockSpec((B_TILE, OH, OW, OC_pad),
                                   lambda n: (n, 0, 0, 0)),
        ),
        compiler_params=pltpu.CompilerParams(
            dimension_semantics=("parallel",),            # shard batch over TCs
            vmem_limit_bytes=vmem_limit,
        ),
        cost_estimate=cost,
    )(x_nhwc, w_r, b_r)

    # Drop the OC pad and return PyTorch's NCHW layout (one fused copy).
    # TODO(synk): in a multi-layer net keep NHWC (and the OC pad) end-to-end to
    # avoid this HBM round trip per layer.
    return jnp.transpose(out_nhwc[..., :OC], (0, 3, 1, 2))


if __name__ == "__main__":
    key = jax.random.PRNGKey(0)
    k1, k2, k3 = jax.random.split(key, 3)

    # Small shapes consistent with the module: Conv2dActivion(4, 8, 3, padding=1)
    N, C, H, W = 2, 4, 16, 16
    OC, KH, KW = 8, 3, 3
    stride, padding = 1, 1

    fan_in = C * KH * KW
    x = jax.random.normal(k1, (N, C, H, W), dtype=jnp.float32)
    w = jax.random.normal(k2, (OC, C, KH, KW), dtype=jnp.float32) / jnp.sqrt(fan_in)
    b = jax.random.normal(k3, (OC,), dtype=jnp.float32) * 0.1

    y = conv2d_activation(x, w, b, stride=stride, padding=padding)
    jax.block_until_ready(y)

    # Reference: XLA conv (highest precision) + bias + ReLU.
    y_ref = jax.lax.conv_general_dilated(
        x, w, (stride, stride), [(padding, padding), (padding, padding)],
        dimension_numbers=("NCHW", "OIHW", "NCHW"),
        precision=jax.lax.Precision.HIGHEST)
    y_ref = jnp.maximum(y_ref + b.reshape(1, OC, 1, 1), 0.0)

    assert y.shape == y_ref.shape and y.dtype == x.dtype
    # Tolerance accounts for bf16 MXU operand passes in the kernel vs. the
    # HIGHEST-precision XLA reference.
    assert jnp.allclose(y, y_ref, atol=2e-2, rtol=2e-2), \
        float(jnp.max(jnp.abs(y - y_ref)))
    print("KERNEL_OK")
</pallas_src>

<mosaic_0001>
module attributes {stable_mosaic.version = 11 : i64} {
  func.func @kernel(%arg0: i32, %arg1: memref<1x18x18x4xf32, #tpu.memory_space<vmem>>, %arg2: memref<36x128xf32, #tpu.memory_space<vmem>>, %arg3: memref<1x128xf32, #tpu.memory_space<vmem>>, %arg4: memref<1x16x16x128xf32, #tpu.memory_space<vmem>>) attributes {dimension_semantics = [#tpu.dimension_semantics<parallel>], iteration_bounds = array<i64: 2>, scalar_prefetch = 0 : i64, scratch_operands = 0 : i64, tpu.core_type = #tpu.core_type<tc>, window_params = [{transform_indices = @transform_0, window_bounds = array<i64: 1, 18, 18, 4>}, {pipeline_mode = #tpu.pipeline_mode<synchronous>, transform_indices = @transform_1, window_bounds = array<i64: 36, 128>}, {pipeline_mode = #tpu.pipeline_mode<synchronous>, transform_indices = @transform_2, window_bounds = array<i64: 1, 128>}, {transform_indices = @transform_3, window_bounds = array<i64: 1, 16, 16, 128>}]} {
    %c0 = arith.constant 0 : index
    %c0_0 = arith.constant 0 : index
    %c0_1 = arith.constant 0 : index
    %c0_2 = arith.constant 0 : index
    %0 = vector.load %arg1[%c0, %c0_0, %c0_1, %c0_2] : memref<1x18x18x4xf32, #tpu.memory_space<vmem>>, vector<1x16x16x4xf32>
    %c0_3 = arith.constant 0 : index
    %c0_4 = arith.constant 0 : index
    %c1 = arith.constant 1 : index
    %c0_5 = arith.constant 0 : index
    %1 = vector.load %arg1[%c0_3, %c0_4, %c1, %c0_5] : memref<1x18x18x4xf32, #tpu.memory_space<vmem>>, vector<1x16x16x4xf32>
    %c0_6 = arith.constant 0 : index
    %c0_7 = arith.constant 0 : index
    %c2 = arith.constant 2 : index
    %c0_8 = arith.constant 0 : index
    %2 = vector.load %arg1[%c0_6, %c0_7, %c2, %c0_8] : memref<1x18x18x4xf32, #tpu.memory_space<vmem>>, vector<1x16x16x4xf32>
    %c0_9 = arith.constant 0 : index
    %c1_10 = arith.constant 1 : index
    %c0_11 = arith.constant 0 : index
    %c0_12 = arith.constant 0 : index
    %3 = vector.load %arg1[%c0_9, %c1_10, %c0_11, %c0_12] : memref<1x18x18x4xf32, #tpu.memory_space<vmem>>, vector<1x16x16x4xf32>
    %c0_13 = arith.constant 0 : index
    %c1_14 = arith.constant 1 : index
    %c1_15 = arith.constant 1 : index
    %c0_16 = arith.constant 0 : index
    %4 = vector.load %arg1[%c0_13, %c1_14, %c1_15, %c0_16] : memref<1x18x18x4xf32, #tpu.memory_space<vmem>>, vector<1x16x16x4xf32>
    %c0_17 = arith.constant 0 : index
    %c1_18 = arith.constant 1 : index
    %c2_19 = arith.constant 2 : index
    %c0_20 = arith.constant 0 : index
    %5 = vector.load %arg1[%c0_17, %c1_18, %c2_19, %c0_20] : memref<1x18x18x4xf32, #tpu.memory_space<vmem>>, vector<1x16x16x4xf32>
    %c0_21 = arith.constant 0 : index
    %c2_22 = arith.constant 2 : index
    %c0_23 = arith.constant 0 : index
    %c0_24 = arith.constant 0 : index
    %6 = vector.load %arg1[%c0_21, %c2_22, %c0_23, %c0_24] : memref<1x18x18x4xf32, #tpu.memory_space<vmem>>, vector<1x16x16x4xf32>
    %c0_25 = arith.constant 0 : index
    %c2_26 = arith.constant 2 : index
    %c1_27 = arith.constant 1 : index
    %c0_28 = arith.constant 0 : index
    %7 = vector.load %arg1[%c0_25, %c2_26, %c1_27, %c0_28] : memref<1x18x18x4xf32, #tpu.memory_space<vmem>>, vector<1x16x16x4xf32>
    %c0_29 = arith.constant 0 : index
    %c2_30 = arith.constant 2 : index
    %c2_31 = arith.constant 2 : index
    %c0_32 = arith.constant 0 : index
    %8 = vector.load %arg1[%c0_29, %c2_30, %c2_31, %c0_32] : memref<1x18x18x4xf32, #tpu.memory_space<vmem>>, vector<1x16x16x4xf32>
    %9 = tpu.concatenate %0, %1, %2, %3, %4, %5, %6, %7, %8 in 3 : vector<1x16x16x4xf32>, vector<1x16x16x4xf32>, vector<1x16x16x4xf32>, vector<1x16x16x4xf32>, vector<1x16x16x4xf32>, vector<1x16x16x4xf32>, vector<1x16x16x4xf32>, vector<1x16x16x4xf32>, vector<1x16x16x4xf32> -> vector<1x16x16x36xf32>
    %10 = vector.shape_cast %9 : vector<1x16x16x36xf32> to vector<256x36xf32>
    %11 = arith.truncf %10 : vector<256x36xf32> to vector<256x36xbf16>
    %c0_33 = arith.constant 0 : index
    %c0_34 = arith.constant 0 : index
    %12 = vector.load %arg2[%c0_33, %c0_34] : memref<36x128xf32, #tpu.memory_space<vmem>>, vector<36x128xf32>
    %13 = arith.truncf %12 : vector<36x128xf32> to vector<36x128xbf16>
    %cst = arith.constant dense<0.000000e+00> : vector<256x128xf32>
    %14 = tpu.matmul %11, %13, %cst {dimension_numbers = #tpu.dot_dimension_numbers<[1], [0], [0], [1], [0, 0, 1, 1], [], []>} : vector<256x36xbf16>, vector<36x128xbf16>, vector<256x128xf32> -> vector<256x128xf32>
    %c0_35 = arith.constant 0 : index
    %c0_36 = arith.constant 0 : index
    %15 = vector.load %arg3[%c0_35, %c0_36] : memref<1x128xf32, #tpu.memory_space<vmem>>, vector<1x128xf32>
    %16 = vector.broadcast %15 : vector<1x128xf32> to vector<256x128xf32>
    %17 = arith.addf %14, %16 : vector<256x128xf32>
    %cst_37 = arith.constant 0.000000e+00 : f32
    %18 = vector.broadcast %cst_37 : f32 to vector<256x128xf32>
    %19 = arith.maximumf %17, %18 : vector<256x128xf32>
    %20 = vector.shape_cast %19 : vector<256x128xf32> to vector<1x16x16x128xf32>
    %c0_38 = arith.constant 0 : index
    %c0_39 = arith.constant 0 : index
    %c0_40 = arith.constant 0 : index
    %c0_41 = arith.constant 0 : index
    %21 = vector.load %arg4[%c0_38, %c0_39, %c0_40, %c0_41] : memref<1x16x16x128xf32, #tpu.memory_space<vmem>>, vector<1x16x16x128xf32>
    tpu.vector_store %arg4[%c0_38, %c0_39, %c0_40, %c0_41], %20 {strides = array<i32>} : memref<1x16x16x128xf32, #tpu.memory_space<vmem>>, vector<1x16x16x128xf32>,
    return
  }
  func.func @transform_0(%arg0: i32) -> (i32, i32, i32, i32) {
    %c0_i32 = arith.constant 0 : i32
    %c0_i32_0 = arith.constant 0 : i32
    %c0_i32_1 = arith.constant 0 : i32
    %c0_i32_2 = arith.constant 0 : i32
    return %arg0, %c0_i32, %c0_i32_0, %c0_i32_1 : i32, i32, i32, i32
  }
  func.func @transform_1(%arg0: i32) -> (i32, i32) {
    %c0_i32 = arith.constant 0 : i32
    %c0_i32_0 = arith.constant 0 : i32
    %c0_i32_1 = arith.constant 0 : i32
    return %c0_i32, %c0_i32_0 : i32, i32
  }
  func.func @transform_2(%arg0: i32) -> (i32, i32) {
    %c0_i32 = arith.constant 0 : i32
    %c0_i32_0 = arith.constant 0 : i32
    %c0_i32_1 = arith.constant 0 : i32
    return %c0_i32, %c0_i32_0 : i32, i32
  }
  func.func @transform_3(%arg0: i32) -> (i32, i32, i32, i32) {
    %c0_i32 = arith.constant 0 : i32
    %c0_i32_0 = arith.constant 0 : i32
    %c0_i32_1 = arith.constant 0 : i32
    %c0_i32_2 = arith.constant 0 : i32
    return %arg0, %c0_i32, %c0_i32_0, %c0_i32_1 : i32, i32, i32, i32
  }
}

</mosaic_0001>

<llo_original>
// kernel: tpu_custom_call.1
$region0: #{tpu_custom_call.1}
  #allocation0 [shape = 'u32[]', space=smem, size = 0x4, offset = 0x4, fixed_abs, tag = 'smem constant byte address 0x4 - core index']
  #allocation1 [shape = 'u32[144,128]{1,0:T(1,128)}', space=vmem, size = 0x12000, scoped, tag = 'internal scratch']
  %s0 = inlined_call_operand.vmem [shape: f32[2,18,18,4], index: 0, kind: input, shape index: {}]
  %s1 = inlined_call_operand.vmem [shape: f32[36,128], index: 1, kind: input, shape index: {}]
  %s2 = inlined_call_operand.vmem [shape: f32[1,128], index: 2, kind: input, shape index: {}]
  %s3 = inlined_call_operand.hbm [shape: f32[2,16,16,128], index: 3, kind: output, shape index: {}]
  %s4 = sld [smem:[#allocation0]]
  $region45: #{tpu_custom_call.1} parent=0
    _
  %s6 = ssub.s32 1, %s4
  %s7 = scalar_select 0, %s6, %s4
  $region1: #{tpu_custom_call.1} parent=0
    #allocation2 [shape = 'u8[262144]{0}', space=vmem, size = 0x40000, scoped, tag = 'output window, operand 0']
    #allocation3 [shape = 's32[2]{0}', space=sflag, size = 0x8, scoped, tag = 'scoped memory for tpu_custom_call.1']
    %8 = vsyncpa [#allocation3], 0
    %s9 = scalar_lea.sflag [#allocation3], 1
    %10 = vsyncpa %s9, 0
    loop: start=0, step=1, limit=4
    $region2: #{tpu_custom_call.1} parent=1 // loop_pre_header
      _
    $region3: #{tpu_custom_call.1} parent=1 // loop_header
      %s12 = sphi 0, %s16
      %p13 = scmp.ge.s32.totalorder %s12, 4
      %s22 = sphi 0, %s24
      %s25 = sphi 0, %s22
      %s26 = sphi 0, %s25
      %s42 = sphi 0, %s26
      %s46 = sphi 0, %s46
      %s48 = sphi 0, %s46
      %s49 = sphi 0, %s48
      %s63 = sphi 0, %s49
      %s67 = sphi 0, %s67
      %s69 = sphi 0, %s67
      %s70 = sphi 0, %s69
      %s84 = sphi 0, %s70
      %s90 = sphi 0, %s92
      %s93 = sphi 0, %s90
      %s94 = sphi 0, %s93
      %s110 = sphi 0, %s94
    $region4: #{tpu_custom_call.1} parent=1 // loop_header_branch
      %15 = sbr.rel (%p13) target = $region8
    $region5: #{tpu_custom_call.1} parent=1 // loop_body
      %s17 = ssub.s32 %s12, 1
      %s18 = ssub.s32 %s12, 2
      %s19 = sadd.s32 %s12, 1
      %s20 = ssub.s32 %s12, %s19
      %p21 = scmp.eq.s32.totalorder %s20, 0
      %s23 = sadd.s32 %s22, 1
      %s24 = scalar_select %p21, %s22, %s23
      %p27 = pneg %p21
      %p28 = scmp.eq.s32.totalorder %s12, 1
      %p29 = por %p27, %p28
      %p30 = scmp.ne.s32.totalorder %s22, %s25
      %p31 = scmp.eq.s32.totalorder %s12, 0
      %p32 = por %p30, %p31
      %p33 = scmp.ne.s32.totalorder %s22, %s25
      %p34 = scmp.eq.s32.totalorder %s17, 1
      %p35 = por %p33, %p34
      %p36 = scmp.ne.s32.totalorder %s25, %s26
      %p37 = scmp.eq.s32.totalorder %s17, 0
      %p38 = por %p36, %p37
      %p39 = scmp.ne.s32.totalorder %s25, %s26
      %p40 = scmp.eq.s32.totalorder %s18, 1
      %p41 = por %p39, %p40
      %p43 = scmp.ne.s32.totalorder %s26, %s42
      %p44 = scmp.eq.s32.totalorder %s18, 0
      %p45 = por %p43, %p44
      %s47 = sadd.s32 %s46, 1
      %p50 = scmp.eq.s32.totalorder %s12, 1
      %p51 = scmp.ne.s32.totalorder %s46, %s48
      %p52 = scmp.eq.s32.totalorder %s12, 0
      %p53 = por %p51, %p52
      %p54 = scmp.ne.s32.totalorder %s46, %s48
      %p55 = scmp.eq.s32.totalorder %s17, 1
      %p56 = por %p54, %p55
      %p57 = scmp.ne.s32.totalorder %s48, %s49
      %p58 = scmp.eq.s32.totalorder %s17, 0
      %p59 = por %p57, %p58
      %p60 = scmp.ne.s32.totalorder %s48, %s49
      %p61 = scmp.eq.s32.totalorder %s18, 1
      %p62 = por %p60, %p61
      %p64 = scmp.ne.s32.totalorder %s49, %s63
      %p65 = scmp.eq.s32.totalorder %s18, 0
      %p66 = por %p64, %p65
      %s68 = sadd.s32 %s67, 1
      %p71 = scmp.eq.s32.totalorder %s12, 1
      %p72 = scmp.ne.s32.totalorder %s67, %s69
      %p73 = scmp.eq.s32.totalorder %s12, 0
      %p74 = por %p72, %p73
      %p75 = scmp.ne.s32.totalorder %s67, %s69
      %p76 = scmp.eq.s32.totalorder %s17, 1
      %p77 = por %p75, %p76
      %p78 = scmp.ne.s32.totalorder %s69, %s70
      %p79 = scmp.eq.s32.totalorder %s17, 0
      %p80 = por %p78, %p79
      %p81 = scmp.ne.s32.totalorder %s69, %s70
      %p82 = scmp.eq.s32.totalorder %s18, 1
      %p83 = por %p81, %p82
      %p85 = scmp.ne.s32.totalorder %s70, %s84
      %p86 = scmp.eq.s32.totalorder %s18, 0
      %p87 = por %p85, %p86
      %s88 = ssub.s32 %s12, %s19
      %p89 = scmp.eq.s32.totalorder %s88, 0
      %s91 = sadd.s32 %s90, 1
      %s92 = scalar_select %p89, %s90, %s91
      %p95 = pneg %p89
      %p96 = scmp.eq.s32.totalorder %s12, 1
      %p97 = por %p95, %p96
      %p98 = scmp.ne.s32.totalorder %s90, %s93
      %p99 = scmp.eq.s32.totalorder %s12, 0
      %p100 = por %p98, %p99
      %p101 = scmp.ne.s32.totalorder %s90, %s93
      %p102 = scmp.eq.s32.totalorder %s17, 1
      %p103 = por %p101, %p102
      %p104 = scmp.ne.s32.totalorder %s93, %s94
      %p105 = scmp.eq.s32.totalorder %s17, 0
      %p106 = por %p104, %p105
      %p107 = scmp.ne.s32.totalorder %s93, %s94
      %p108 = scmp.eq.s32.totalorder %s18, 1
      %p109 = por %p107, %p108
      %p111 = scmp.ne.s32.totalorder %s94, %s110
      %p112 = scmp.eq.s32.totalorder %s18, 0
      %p113 = por %p111, %p112
      %p114 = scmp.le.s32.totalorder 1, %s12
      %p115 = scmp.lt.s32.totalorder %s12, 3
      %p116 = pnand %p114, %p115
      %p117 = pneg %p116
      // Predicated region
      $region9: #{tpu_custom_call.1} parent=5 // pred_check
        _
      $region10: #{tpu_custom_call.1} parent=5 // pred_check_branch
        %119 = sbr.rel (%p116) target = $region12
      $region11: #{tpu_custom_call.1} parent=5 // pred_region
        %s120 = ssub.s32 %s12, 1
        // Predicated region
        $region13: #{tpu_custom_call.1} parent=11 // pred_check
          %p121 = pneg %p59
        $region14: #{tpu_custom_call.1} parent=11 // pred_check_branch
          %123 = sbr.rel (%p121) target = $region16
        $region15: #{tpu_custom_call.1} parent=11 // pred_region
          _
        $region16: #{tpu_custom_call.1} parent=11 // pred_fallthru
          _
        // Predicated region
        $region17: #{tpu_custom_call.1} parent=11 // pred_check
          %p124 = pneg %p80
        $region18: #{tpu_custom_call.1} parent=11 // pred_check_branch
          %126 = sbr.rel (%p124) target = $region20
        $region19: #{tpu_custom_call.1} parent=11 // pred_region
          _
        $region20: #{tpu_custom_call.1} parent=11 // pred_fallthru
          _
      $region12: #{tpu_custom_call.1} parent=5 // pred_fallthru
        _
      %p127 = scmp.lt.s32.totalorder %s12, 2
      // Predicated region
      $region21: #{tpu_custom_call.1} parent=5 // pred_check
        %p128 = pneg %p127
      $region22: #{tpu_custom_call.1} parent=5 // pred_check_branch
        %130 = sbr.rel (%p128) target = $region24
      $region23: #{tpu_custom_call.1} parent=5 // pred_region
        // Predicated region
        $region25: #{tpu_custom_call.1} parent=23 // pred_check
          %p131 = pneg %p32
        $region26: #{tpu_custom_call.1} parent=23 // pred_check_branch
          %133 = sbr.rel (%p131) target = $region28
        $region27: #{tpu_custom_call.1} parent=23 // pred_region
          %p134 = scmp.lt.s32.totalorder %s12, 1
          %s135 = scalar_select %p134, %s12, 1
          %s136 = smul.addr %s135, 54
          %s137 = smul.addr %s136, 8
          %s138 = scalar_lea.vmem %s0, %s137
        $region28: #{tpu_custom_call.1} parent=23 // pred_fallthru
          _
      $region24: #{tpu_custom_call.1} parent=5 // pred_fallthru
        _
      %p139 = scmp.le.s32.totalorder 1, %s12
      %p140 = scmp.lt.s32.totalorder %s12, 3
      %p141 = pnand %p139, %p140
      %p142 = pneg %p141
      // Predicated region
      $region29: #{tpu_custom_call.1} parent=5 // pred_check
        _
      $region30: #{tpu_custom_call.1} parent=5 // pred_check_branch
        %144 = sbr.rel (%p141) target = $region32
      $region31: #{tpu_custom_call.1} parent=5 // pred_region
        %s145 = ssub.s32 %s12, 1
        %p146 = scmp.lt.s32.totalorder %s17, 1
        %s147 = scalar_select %p146, %s17, 1
        %s148 = smul.addr %s147, 54
        %s149 = smul.addr %s148, 8
        %s150 = scalar_lea.vmem %s0, %s149
        %p151 = pneg %p38
        %p152 = pneg %p35
        %p153 = pneg %p59
        %p154 = pneg %p56
        %p155 = pneg %p80
        %p156 = pneg %p77
        %p157 = pneg %p106
        %p158 = pneg %p103
        %s159 = sand.u32 %s93, 1
        %s160 = scalar_lea.sflag [#allocation3], %s159
        %s161 = sand.u32 %s93, 1
        %s162 = smul.addr %s161, 256
        %s163 = scalar_lea.vmem [#allocation2], %s162
        %p164 = scmp.lt.s32.totalorder %s17, 1
        %s165 = scalar_select %p164, %s17, 1
        %s166 = smul.addr %s165, 54
        %s167 = smul.addr %s166, 8
        %s168 = scalar_lea.vmem %s0, %s167
        %v170 = vld [vmem:[%s168] sm:$0xff]
        %v171 = vld [vmem:[%s168 + $0x8] sm:$0xff]
        %v172 = vld [vmem:[%s168 + $0x18] sm:$0xff]
        %v173 = vld [vmem:[%s168 + $0x20] sm:$0xff]
        %v174 = vld [vmem:[%s168 + $0x30] sm:$0xff]
        %v175 = vld [vmem:[%s168 + $0x38] sm:$0xff]
        %v176 = vld [vmem:[%s168 + $0x48] sm:$0xff]
        %v177 = vld [vmem:[%s168 + $0x50] sm:$0xff]
        %v178 = vld [vmem:[%s168 + $0x60] sm:$0xff]
        %v179 = vld [vmem:[%s168 + $0x68] sm:$0xff]
        %v180 = vld [vmem:[%s168 + $0x78] sm:$0xff]
        %v181 = vld [vmem:[%s168 + $0x80] sm:$0xff]
        %v182 = vld [vmem:[%s168 + $0x90] sm:$0xff]
        %v183 = vld [vmem:[%s168 + $0x98] sm:$0xff]
        %v184 = vld [vmem:[%s168 + $0xa8] sm:$0xff]
        %v185 = vld [vmem:[%s168 + $0xb0] sm:$0xff]
        %v186 = vld [vmem:[%s168 + $0xc0] sm:$0xff]
        %v187 = vld [vmem:[%s168 + $0xc8] sm:$0xff]
        %v188 = vld [vmem:[%s168 + $0xd8] sm:$0xff]
        %v189 = vld [vmem:[%s168 + $0xe0] sm:$0xff]
        %v190 = vld [vmem:[%s168 + $0xf0] sm:$0xff]
        %v191 = vld [vmem:[%s168 + $0xf8] sm:$0xff]
        %v192 = vld [vmem:[%s168 + $0x108] sm:$0xff]
        %v193 = vld [vmem:[%s168 + $0x110] sm:$0xff]
        %v194 = vld [vmem:[%s168 + $0x120] sm:$0xff]
        %v195 = vld [vmem:[%s168 + $0x128] sm:$0xff]
        %v196 = vld [vmem:[%s168 + $0x138] sm:$0xff]
        %v197 = vld [vmem:[%s168 + $0x140] sm:$0xff]
        %v198 = vld [vmem:[%s168 + $0x150] sm:$0xff]
        %v199 = vld [vmem:[%s168 + $0x158] sm:$0xff]
        %v200 = vld [vmem:[%s168 + $0x168] sm:$0xff]
        %v201 = vld [vmem:[%s168 + $0x170] sm:$0xff]
        %v202 = vld [vmem:[%s168 + $0x1] sm:$0xff]
        %v203 = vld [vmem:[%s168 + $0x9] sm:$0xff]
        %v204 = vld [vmem:[%s168 + $0x19] sm:$0xff]
        %v205 = vld [vmem:[%s168 + $0x21] sm:$0xff]
        %v206 = vld [vmem:[%s168 + $0x31] sm:$0xff]
        %v207 = vld [vmem:[%s168 + $0x39] sm:$0xff]
        %v208 = vld [vmem:[%s168 + $0x49] sm:$0xff]
        %v209 = vld [vmem:[%s168 + $0x51] sm:$0xff]
        %v210 = vld [vmem:[%s168 + $0x61] sm:$0xff]
        %v211 = vld [vmem:[%s168 + $0x69] sm:$0xff]
        %v212 = vld [vmem:[%s168 + $0x79] sm:$0xff]
        %v213 = vld [vmem:[%s168 + $0x81] sm:$0xff]
        %v214 = vld [vmem:[%s168 + $0x91] sm:$0xff]
        %v215 = vld [vmem:[%s168 + $0x99] sm:$0xff]
        %v216 = vld [vmem:[%s168 + $0xa9] sm:$0xff]
        %v217 = vld [vmem:[%s168 + $0xb1] sm:$0xff]
        %v218 = vld [vmem:[%s168 + $0xc1] sm:$0xff]
        %v219 = vld [vmem:[%s168 + $0xc9] sm:$0xff]
        %v220 = vld [vmem:[%s168 + $0xd9] sm:$0xff]
        %v221 = vld [vmem:[%s168 + $0xe1] sm:$0xff]
        %v222 = vld [vmem:[%s168 + $0xf1] sm:$0xff]
        %v223 = vld [vmem:[%s168 + $0xf9] sm:$0xff]
        %v224 = vld [vmem:[%s168 + $0x109] sm:$0xff]
        %v225 = vld [vmem:[%s168 + $0x111] sm:$0xff]
        %v226 = vld [vmem:[%s168 + $0x121] sm:$0xff]
        %v227 = vld [vmem:[%s168 + $0x129] sm:$0xff]
        %v228 = vld [vmem:[%s168 + $0x139] sm:$0xff]
        %v229 = vld [vmem:[%s168 + $0x141] sm:$0xff]
        %v230 = vld [vmem:[%s168 + $0x151] sm:$0xff]
        %v231 = vld [vmem:[%s168 + $0x159] sm:$0xff]
        %v232 = vld [vmem:[%s168 + $0x169] sm:$0xff]
        %v233 = vld [vmem:[%s168 + $0x171] sm:$0xff]
        %v234 = vld [vmem:[%s168 + $0x2] sm:$0xff]
        %v235 = vld [vmem:[%s168 + $0xa] sm:$0xff]
        %v236 = vld [vmem:[%s168 + $0x1a] sm:$0xff]
        %v237 = vld [vmem:[%s168 + $0x22] sm:$0xff]
        %v238 = vld [vmem:[%s168 + $0x32] sm:$0xff]
        %v239 = vld [vmem:[%s168 + $0x3a] sm:$0xff]
        %v240 = vld [vmem:[%s168 + $0x4a] sm:$0xff]
        %v241 = vld [vmem:[%s168 + $0x52] sm:$0xff]
        %v242 = vld [vmem:[%s168 + $0x62] sm:$0xff]
        %v243 = vld [vmem:[%s168 + $0x6a] sm:$0xff]
        %v244 = vld [vmem:[%s168 + $0x7a] sm:$0xff]
        %v245 = vld [vmem:[%s168 + $0x82] sm:$0xff]
        %v246 = vld [vmem:[%s168 + $0x92] sm:$0xff]
        %v247 = vld [vmem:[%s168 + $0x9a] sm:$0xff]
        %v248 = vld [vmem:[%s168 + $0xaa] sm:$0xff]
        %v249 = vld [vmem:[%s168 + $0xb2] sm:$0xff]
        %v250 = vld [vmem:[%s168 + $0xc2] sm:$0xff]
        %v251 = vld [vmem:[%s168 + $0xca] sm:$0xff]
        %v252 = vld [vmem:[%s168 + $0xda] sm:$0xff]
        %v253 = vld [vmem:[%s168 + $0xe2] sm:$0xff]
        %v254 = vld [vmem:[%s168 + $0xf2] sm:$0xff]
        %v255 = vld [vmem:[%s168 + $0xfa] sm:$0xff]
        %v256 = vld [vmem:[%s168 + $0x10a] sm:$0xff]
        %v257 = vld [vmem:[%s168 + $0x112] sm:$0xff]
        %v258 = vld [vmem:[%s168 + $0x122] sm:$0xff]
        %v259 = vld [vmem:[%s168 + $0x12a] sm:$0xff]
        %v260 = vld [vmem:[%s168 + $0x13a] sm:$0xff]
        %v261 = vld [vmem:[%s168 + $0x142] sm:$0xff]
        %v262 = vld [vmem:[%s168 + $0x152] sm:$0xff]
        %v263 = vld [vmem:[%s168 + $0x15a] sm:$0xff]
        %v264 = vld [vmem:[%s168 + $0x16a] sm:$0xff]
        %v265 = vld [vmem:[%s168 + $0x172] sm:$0xff]
        %s266 = scalar_lea.vmem %s168, 24
        %v267 = vld [vmem:[%s266] sm:$0xff]
        %v268 = vld [vmem:[%s266 + $0x8] sm:$0xff]
        %v269 = vld [vmem:[%s266 + $0x18] sm:$0xff]
        %v270 = vld [vmem:[%s266 + $0x20] sm:$0xff]
        %v271 = vld [vmem:[%s266 + $0x30] sm:$0xff]
        %v272 = vld [vmem:[%s266 + $0x38] sm:$0xff]
        %v273 = vld [vmem:[%s266 + $0x48] sm:$0xff]
        %v274 = vld [vmem:[%s266 + $0x50] sm:$0xff]
        %v275 = vld [vmem:[%s266 + $0x60] sm:$0xff]
        %v276 = vld [vmem:[%s266 + $0x68] sm:$0xff]
        %v277 = vld [vmem:[%s266 + $0x78] sm:$0xff]
        %v278 = vld [vmem:[%s266 + $0x80] sm:$0xff]
        %v279 = vld [vmem:[%s266 + $0x90] sm:$0xff]
        %v280 = vld [vmem:[%s266 + $0x98] sm:$0xff]
        %v281 = vld [vmem:[%s266 + $0xa8] sm:$0xff]
        %v282 = vld [vmem:[%s266 + $0xb0] sm:$0xff]
        %v283 = vld [vmem:[%s266 + $0xc0] sm:$0xff]
        %v284 = vld [vmem:[%s266 + $0xc8] sm:$0xff]
        %v285 = vld [vmem:[%s266 + $0xd8] sm:$0xff]
        %v286 = vld [vmem:[%s266 + $0xe0] sm:$0xff]
        %v287 = vld [vmem:[%s266 + $0xf0] sm:$0xff]
        %v288 = vld [vmem:[%s266 + $0xf8] sm:$0xff]
        %v289 = vld [vmem:[%s266 + $0x108] sm:$0xff]
        %v290 = vld [vmem:[%s266 + $0x110] sm:$0xff]
        %v291 = vld [vmem:[%s266 + $0x120] sm:$0xff]
        %v292 = vld [vmem:[%s266 + $0x128] sm:$0xff]
        %v293 = vld [vmem:[%s266 + $0x138] sm:$0xff]
        %v294 = vld [vmem:[%s266 + $0x140] sm:$0xff]
        %v295 = vld [vmem:[%s266 + $0x150] sm:$0xff]
        %v296 = vld [vmem:[%s266 + $0x158] sm:$0xff]
        %v297 = vld [vmem:[%s266 + $0x168] sm:$0xff]
        %v298 = vld [vmem:[%s266 + $0x170] sm:$0xff]
        %v299 = vld [vmem:[%s266 + $0x1] sm:$0xff]
        %v300 = vld [vmem:[%s266 + $0x9] sm:$0xff]
        %v301 = vld [vmem:[%s266 + $0x19] sm:$0xff]
        %v302 = vld [vmem:[%s266 + $0x21] sm:$0xff]
        %v303 = vld [vmem:[%s266 + $0x31] sm:$0xff]
        %v304 = vld [vmem:[%s266 + $0x39] sm:$0xff]
        %v305 = vld [vmem:[%s266 + $0x49] sm:$0xff]
        %v306 = vld [vmem:[%s266 + $0x51] sm:$0xff]
        %v307 = vld [vmem:[%s266 + $0x61] sm:$0xff]
        %v308 = vld [vmem:[%s266 + $0x69] sm:$0xff]
        %v309 = vld [vmem:[%s266 + $0x79] sm:$0xff]
        %v310 = vld [vmem:[%s266 + $0x81] sm:$0xff]
        %v311 = vld [vmem:[%s266 + $0x91] sm:$0xff]
        %v312 = vld [vmem:[%s266 + $0x99] sm:$0xff]
        %v313 = vld [vmem:[%s266 + $0xa9] sm:$0xff]
        %v314 = vld [vmem:[%s266 + $0xb1] sm:$0xff]
        %v315 = vld [vmem:[%s266 + $0xc1] sm:$0xff]
        %v316 = vld [vmem:[%s266 + $0xc9] sm:$0xff]
        %v317 = vld [vmem:[%s266 + $0xd9] sm:$0xff]
        %v318 = vld [vmem:[%s266 + $0xe1] sm:$0xff]
        %v319 = vld [vmem:[%s266 + $0xf1] sm:$0xff]
        %v320 = vld [vmem:[%s266 + $0xf9] sm:$0xff]
        %v321 = vld [vmem:[%s266 + $0x109] sm:$0xff]
        %v322 = vld [vmem:[%s266 + $0x111] sm:$0xff]
        %v323 = vld [vmem:[%s266 + $0x121] sm:$0xff]
        %v324 = vld [vmem:[%s266 + $0x129] sm:$0xff]
        %v325 = vld [vmem:[%s266 + $0x139] sm:$0xff]
        %v326 = vld [vmem:[%s266 + $0x141] sm:$0xff]
        %v327 = vld [vmem:[%s266 + $0x151] sm:$0xff]
        %v328 = vld [vmem:[%s266 + $0x159] sm:$0xff]
        %v329 = vld [vmem:[%s266 + $0x169] sm:$0xff]
        %v330 = vld [vmem:[%s266 + $0x171] sm:$0xff]
        %v331 = vld [vmem:[%s266 + $0x2] sm:$0xff]
        %v332 = vld [vmem:[%s266 + $0xa] sm:$0xff]
        %v333 = vld [vmem:[%s266 + $0x1a] sm:$0xff]
        %v334 = vld [vmem:[%s266 + $0x22] sm:$0xff]
        %v335 = vld [vmem:[%s266 + $0x32] sm:$0xff]
        %v336 = vld [vmem:[%s266 + $0x3a] sm:$0xff]
        %v337 = vld [vmem:[%s266 + $0x4a] sm:$0xff]
        %v338 = vld [vmem:[%s266 + $0x52] sm:$0xff]
        %v339 = vld [vmem:[%s266 + $0x62] sm:$0xff]
        %v340 = vld [vmem:[%s266 + $0x6a] sm:$0xff]
        %v341 = vld [vmem:[%s266 + $0x7a] sm:$0xff]
        %v342 = vld [vmem:[%s266 + $0x82] sm:$0xff]
        %v343 = vld [vmem:[%s266 + $0x92] sm:$0xff]
        %v344 = vld [vmem:[%s266 + $0x9a] sm:$0xff]
        %v345 = vld [vmem:[%s266 + $0xaa] sm:$0xff]
        %v346 = vld [vmem:[%s266 + $0xb2] sm:$0xff]
        %v347 = vld [vmem:[%s266 + $0xc2] sm:$0xff]
        %v348 = vld [vmem:[%s266 + $0xca] sm:$0xff]
        %v349 = vld [vmem:[%s266 + $0xda] sm:$0xff]
        %v350 = vld [vmem:[%s266 + $0xe2] sm:$0xff]
        %v351 = vld [vmem:[%s266 + $0xf2] sm:$0xff]
        %v352 = vld [vmem:[%s266 + $0xfa] sm:$0xff]
        %v353 = vld [vmem:[%s266 + $0x10a] sm:$0xff]
        %v354 = vld [vmem:[%s266 + $0x112] sm:$0xff]
        %v355 = vld [vmem:[%s266 + $0x122] sm:$0xff]
        %v356 = vld [vmem:[%s266 + $0x12a] sm:$0xff]
        %v357 = vld [vmem:[%s266 + $0x13a] sm:$0xff]
        %v358 = vld [vmem:[%s266 + $0x142] sm:$0xff]
        %v359 = vld [vmem:[%s266 + $0x152] sm:$0xff]
        %v360 = vld [vmem:[%s266 + $0x15a] sm:$0xff]
        %v361 = vld [vmem:[%s266 + $0x16a] sm:$0xff]
        %v362 = vld [vmem:[%s266 + $0x172] sm:$0xff]
        %s363 = scalar_lea.vmem %s168, 48
        %v364 = vld [vmem:[%s363] sm:$0xff]
        %v365 = vld [vmem:[%s363 + $0x8] sm:$0xff]
        %v366 = vld [vmem:[%s363 + $0x18] sm:$0xff]
        %v367 = vld [vmem:[%s363 + $0x20] sm:$0xff]
        %v368 = vld [vmem:[%s363 + $0x30] sm:$0xff]
        %v369 = vld [vmem:[%s363 + $0x38] sm:$0xff]
        %v370 = vld [vmem:[%s363 + $0x48] sm:$0xff]
        %v371 = vld [vmem:[%s363 + $0x50] sm:$0xff]
        %v372 = vld [vmem:[%s363 + $0x60] sm:$0xff]
        %v373 = vld [vmem:[%s363 + $0x68] sm:$0xff]
        %v374 = vld [vmem:[%s363 + $0x78] sm:$0xff]
        %v375 = vld [vmem:[%s363 + $0x80] sm:$0xff]
        %v376 = vld [vmem:[%s363 + $0x90] sm:$0xff]
        %v377 = vld [vmem:[%s363 + $0x98] sm:$0xff]
        %v378 = vld [vmem:[%s363 + $0xa8] sm:$0xff]
        %v379 = vld [vmem:[%s363 + $0xb0] sm:$0xff]
        %v380 = vld [vmem:[%s363 + $0xc0] sm:$0xff]
        %v381 = vld [vmem:[%s363 + $0xc8] sm:$0xff]
        %v382 = vld [vmem:[%s363 + $0xd8] sm:$0xff]
        %v383 = vld [vmem:[%s363 + $0xe0] sm:$0xff]
        %v384 = vld [vmem:[%s363 + $0xf0] sm:$0xff]
        %v385 = vld [vmem:[%s363 + $0xf8] sm:$0xff]
        %v386 = vld [vmem:[%s363 + $0x108] sm:$0xff]
        %v387 = vld [vmem:[%s363 + $0x110] sm:$0xff]
        %v388 = vld [vmem:[%s363 + $0x120] sm:$0xff]
        %v389 = vld [vmem:[%s363 + $0x128] sm:$0xff]
        %v390 = vld [vmem:[%s363 + $0x138] sm:$0xff]
        %v391 = vld [vmem:[%s363 + $0x140] sm:$0xff]
        %v392 = vld [vmem:[%s363 + $0x150] sm:$0xff]
        %v393 = vld [vmem:[%s363 + $0x158] sm:$0xff]
        %v394 = vld [vmem:[%s363 + $0x168] sm:$0xff]
        %v395 = vld [vmem:[%s363 + $0x170] sm:$0xff]
        %v396 = vld [vmem:[%s363 + $0x1] sm:$0xff]
        %v397 = vld [vmem:[%s363 + $0x9] sm:$0xff]
        %v398 = vld [vmem:[%s363 + $0x19] sm:$0xff]
        %v399 = vld [vmem:[%s363 + $0x21] sm:$0xff]
        %v400 = vld [vmem:[%s363 + $0x31] sm:$0xff]
        %v401 = vld [vmem:[%s363 + $0x39] sm:$0xff]
        %v402 = vld [vmem:[%s363 + $0x49] sm:$0xff]
        %v403 = vld [vmem:[%s363 + $0x51] sm:$0xff]
        %v404 = vld [vmem:[%s363 + $0x61] sm:$0xff]
        %v405 = vld [vmem:[%s363 + $0x69] sm:$0xff]
        %v406 = vld [vmem:[%s363 + $0x79] sm:$0xff]
        %v407 = vld [vmem:[%s363 + $0x81] sm:$0xff]
        %v408 = vld [vmem:[%s363 + $0x91] sm:$0xff]
        %v409 = vld [vmem:[%s363 + $0x99] sm:$0xff]
        %v410 = vld [vmem:[%s363 + $0xa9] sm:$0xff]
        %v411 = vld [vmem:[%s363 + $0xb1] sm:$0xff]
        %v412 = vld [vmem:[%s363 + $0xc1] sm:$0xff]
        %v413 = vld [vmem:[%s363 + $0xc9] sm:$0xff]
        %v414 = vld [vmem:[%s363 + $0xd9] sm:$0xff]
        %v415 = vld [vmem:[%s363 + $0xe1] sm:$0xff]
        %v416 = vld [vmem:[%s363 + $0xf1] sm:$0xff]
        %v417 = vld [vmem:[%s363 + $0xf9] sm:$0xff]
        %v418 = vld [vmem:[%s363 + $0x109] sm:$0xff]
        %v419 = vld [vmem:[%s363 + $0x111] sm:$0xff]
        %v420 = vld [vmem:[%s363 + $0x121] sm:$0xff]
        %v421 = vld [vmem:[%s363 + $0x129] sm:$0xff]
        %v422 = vld [vmem:[%s363 + $0x139] sm:$0xff]
        %v423 = vld [vmem:[%s363 + $0x141] sm:$0xff]
        %v424 = vld [vmem:[%s363 + $0x151] sm:$0xff]
        %v425 = vld [vmem:[%s363 + $0x159] sm:$0xff]
        %v426 = vld [vmem:[%s363 + $0x169] sm:$0xff]
        %v427 = vld [vmem:[%s363 + $0x171] sm:$0xff]
        %v428 = vld [vmem:[%s363 + $0x2] sm:$0xff]
        %v429 = vld [vmem:[%s363 + $0xa] sm:$0xff]
        %v430 = vld [vmem:[%s363 + $0x1a] sm:$0xff]
        %v431 = vld [vmem:[%s363 + $0x22] sm:$0xff]
        %v432 = vld [vmem:[%s363 + $0x32] sm:$0xff]
        %v433 = vld [vmem:[%s363 + $0x3a] sm:$0xff]
        %v434 = vld [vmem:[%s363 + $0x4a] sm:$0xff]
        %v435 = vld [vmem:[%s363 + $0x52] sm:$0xff]
        %v436 = vld [vmem:[%s363 + $0x62] sm:$0xff]
        %v437 = vld [vmem:[%s363 + $0x6a] sm:$0xff]
        %v438 = vld [vmem:[%s363 + $0x7a] sm:$0xff]
        %v439 = vld [vmem:[%s363 + $0x82] sm:$0xff]
        %v440 = vld [vmem:[%s363 + $0x92] sm:$0xff]
        %v441 = vld [vmem:[%s363 + $0x9a] sm:$0xff]
        %v442 = vld [vmem:[%s363 + $0xaa] sm:$0xff]
        %v443 = vld [vmem:[%s363 + $0xb2] sm:$0xff]
        %v444 = vld [vmem:[%s363 + $0xc2] sm:$0xff]
        %v445 = vld [vmem:[%s363 + $0xca] sm:$0xff]
        %v446 = vld [vmem:[%s363 + $0xda] sm:$0xff]
        %v447 = vld [vmem:[%s363 + $0xe2] sm:$0xff]
        %v448 = vld [vmem:[%s363 + $0xf2] sm:$0xff]
        %v449 = vld [vmem:[%s363 + $0xfa] sm:$0xff]
        %v450 = vld [vmem:[%s363 + $0x10a] sm:$0xff]
        %v451 = vld [vmem:[%s363 + $0x112] sm:$0xff]
        %v452 = vld [vmem:[%s363 + $0x122] sm:$0xff]
        %v453 = vld [vmem:[%s363 + $0x12a] sm:$0xff]
        %v454 = vld [vmem:[%s363 + $0x13a] sm:$0xff]
        %v455 = vld [vmem:[%s363 + $0x142] sm:$0xff]
        %v456 = vld [vmem:[%s363 + $0x152] sm:$0xff]
        %v457 = vld [vmem:[%s363 + $0x15a] sm:$0xff]
        %v458 = vld [vmem:[%s363 + $0x16a] sm:$0xff]
        %v459 = vld [vmem:[%s363 + $0x172] sm:$0xff]
        %492 = vrot.lane.b32.xlu0 %v202, 4
        %v493 = vpop.permute.xlu0 %492
        %494 = vrot.lane.b32.xlu0 %v203, 4
        %v495 = vpop.permute.xlu0 %494
        %496 = vrot.lane.b32.xlu0 %v204, 4
        %v497 = vpop.permute.xlu0 %496
        %498 = vrot.lane.b32.xlu0 %v205, 4
        %v499 = vpop.permute.xlu0 %498
        %500 = vrot.lane.b32.xlu0 %v206, 4
        %v501 = vpop.permute.xlu0 %500
        %502 = vrot.lane.b32.xlu0 %v207, 4
        %v503 = vpop.permute.xlu0 %502
        %504 = vrot.lane.b32.xlu0 %v208, 4
        %v505 = vpop.permute.xlu0 %504
        %506 = vrot.lane.b32.xlu0 %v209, 4
        %v507 = vpop.permute.xlu0 %506
        %508 = vrot.lane.b32.xlu0 %v210, 4
        %v509 = vpop.permute.xlu0 %508
        %510 = vrot.lane.b32.xlu0 %v211, 4
        %v511 = vpop.permute.xlu0 %510
        %512 = vrot.lane.b32.xlu0 %v212, 4
        %v513 = vpop.permute.xlu0 %512
        %514 = vrot.lane.b32.xlu0 %v213, 4
        %v515 = vpop.permute.xlu0 %514
        %516 = vrot.lane.b32.xlu0 %v214, 4
        %v517 = vpop.permute.xlu0 %516
        %518 = vrot.lane.b32.xlu0 %v215, 4
        %v519 = vpop.permute.xlu0 %518
        %520 = vrot.lane.b32.xlu0 %v216, 4
        %v521 = vpop.permute.xlu0 %520
        %522 = vrot.lane.b32.xlu0 %v217, 4
        %v523 = vpop.permute.xlu0 %522
        %524 = vrot.lane.b32.xlu0 %v218, 4
        %v525 = vpop.permute.xlu0 %524
        %526 = vrot.lane.b32.xlu0 %v219, 4
        %v527 = vpop.permute.xlu0 %526
        %528 = vrot.lane.b32.xlu0 %v220, 4
        %v529 = vpop.permute.xlu0 %528
        %530 = vrot.lane.b32.xlu0 %v221, 4
        %v531 = vpop.permute.xlu0 %530
        %532 = vrot.lane.b32.xlu0 %v222, 4
        %v533 = vpop.permute.xlu0 %532
        %534 = vrot.lane.b32.xlu0 %v223, 4
        %v535 = vpop.permute.xlu0 %534
        %536 = vrot.lane.b32.xlu0 %v224, 4
        %v537 = vpop.permute.xlu0 %536
        %538 = vrot.lane.b32.xlu0 %v225, 4
        %v539 = vpop.permute.xlu0 %538
        %540 = vrot.lane.b32.xlu0 %v226, 4
        %v541 = vpop.permute.xlu0 %540
        %542 = vrot.lane.b32.xlu0 %v227, 4
        %v543 = vpop.permute.xlu0 %542
        %544 = vrot.lane.b32.xlu0 %v228, 4
        %v545 = vpop.permute.xlu0 %544
        %546 = vrot.lane.b32.xlu0 %v229, 4
        %v547 = vpop.permute.xlu0 %546
        %548 = vrot.lane.b32.xlu0 %v230, 4
        %v549 = vpop.permute.xlu0 %548
        %550 = vrot.lane.b32.xlu0 %v231, 4
        %v551 = vpop.permute.xlu0 %550
        %552 = vrot.lane.b32.xlu0 %v232, 4
        %v553 = vpop.permute.xlu0 %552
        %554 = vrot.lane.b32.xlu0 %v233, 4
        %v555 = vpop.permute.xlu0 %554
        %620 = vrot.lane.b32.xlu0 %v234, 8
        %v621 = vpop.permute.xlu0 %620
        %622 = vrot.lane.b32.xlu0 %v235, 8
        %v623 = vpop.permute.xlu0 %622
        %624 = vrot.lane.b32.xlu0 %v236, 8
        %v625 = vpop.permute.xlu0 %624
        %626 = vrot.lane.b32.xlu0 %v237, 8
        %v627 = vpop.permute.xlu0 %626
        %628 = vrot.lane.b32.xlu0 %v238, 8
        %v629 = vpop.permute.xlu0 %628
        %630 = vrot.lane.b32.xlu0 %v239, 8
        %v631 = vpop.permute.xlu0 %630
        %632 = vrot.lane.b32.xlu0 %v240, 8
        %v633 = vpop.permute.xlu0 %632
        %634 = vrot.lane.b32.xlu0 %v241, 8
        %v635 = vpop.permute.xlu0 %634
        %636 = vrot.lane.b32.xlu0 %v242, 8
        %v637 = vpop.permute.xlu0 %636
        %638 = vrot.lane.b32.xlu0 %v243, 8
        %v639 = vpop.permute.xlu0 %638
        %640 = vrot.lane.b32.xlu0 %v244, 8
        %v641 = vpop.permute.xlu0 %640
        %642 = vrot.lane.b32.xlu0 %v245, 8
        %v643 = vpop.permute.xlu0 %642
        %644 = vrot.lane.b32.xlu0 %v246, 8
        %v645 = vpop.permute.xlu0 %644
        %646 = vrot.lane.b32.xlu0 %v247, 8
        %v647 = vpop.permute.xlu0 %646
        %648 = vrot.lane.b32.xlu0 %v248, 8
        %v649 = vpop.permute.xlu0 %648
        %650 = vrot.lane.b32.xlu0 %v249, 8
        %v651 = vpop.permute.xlu0 %650
        %652 = vrot.lane.b32.xlu0 %v250, 8
        %v653 = vpop.permute.xlu0 %652
        %654 = vrot.lane.b32.xlu0 %v251, 8
        %v655 = vpop.permute.xlu0 %654
        %656 = vrot.lane.b32.xlu0 %v252, 8
        %v657 = vpop.permute.xlu0 %656
        %658 = vrot.lane.b32.xlu0 %v253, 8
        %v659 = vpop.permute.xlu0 %658
        %660 = vrot.lane.b32.xlu0 %v254, 8
        %v661 = vpop.permute.xlu0 %660
        %662 = vrot.lane.b32.xlu0 %v255, 8
        %v663 = vpop.permute.xlu0 %662
        %664 = vrot.lane.b32.xlu0 %v256, 8
        %v665 = vpop.permute.xlu0 %664
        %666 = vrot.lane.b32.xlu0 %v257, 8
        %v667 = vpop.permute.xlu0 %666
        %668 = vrot.lane.b32.xlu0 %v258, 8
        %v669 = vpop.permute.xlu0 %668
        %670 = vrot.lane.b32.xlu0 %v259, 8
        %v671 = vpop.permute.xlu0 %670
        %672 = vrot.lane.b32.xlu0 %v260, 8
        %v673 = vpop.permute.xlu0 %672
        %674 = vrot.lane.b32.xlu0 %v261, 8
        %v675 = vpop.permute.xlu0 %674
        %676 = vrot.lane.b32.xlu0 %v262, 8
        %v677 = vpop.permute.xlu0 %676
        %678 = vrot.lane.b32.xlu0 %v263, 8
        %v679 = vpop.permute.xlu0 %678
        %680 = vrot.lane.b32.xlu0 %v264, 8
        %v681 = vpop.permute.xlu0 %680
        %682 = vrot.lane.b32.xlu0 %v265, 8
        %v683 = vpop.permute.xlu0 %682
        %748 = vrot.lane.b32.xlu0 %v267, 12
        %v749 = vpop.permute.xlu0 %748
        %750 = vrot.lane.b32.xlu0 %v268, 12
        %v751 = vpop.permute.xlu0 %750
        %752 = vrot.lane.b32.xlu0 %v269, 12
        %v753 = vpop.permute.xlu0 %752
        %754 = vrot.lane.b32.xlu0 %v270, 12
        %v755 = vpop.permute.xlu0 %754
        %756 = vrot.lane.b32.xlu0 %v271, 12
        %v757 = vpop.permute.xlu0 %756
        %758 = vrot.lane.b32.xlu0 %v272, 12
        %v759 = vpop.permute.xlu0 %758
        %760 = vrot.lane.b32.xlu0 %v273, 12
        %v761 = vpop.permute.xlu0 %760
        %762 = vrot.lane.b32.xlu0 %v274, 12
        %v763 = vpop.permute.xlu0 %762
        %764 = vrot.lane.b32.xlu0 %v275, 12
        %v765 = vpop.permute.xlu0 %764
        %766 = vrot.lane.b32.xlu0 %v276, 12
        %v767 = vpop.permute.xlu0 %766
        %768 = vrot.lane.b32.xlu0 %v277, 12
        %v769 = vpop.permute.xlu0 %768
        %770 = vrot.lane.b32.xlu0 %v278, 12
        %v771 = vpop.permute.xlu0 %770
        %772 = vrot.lane.b32.xlu0 %v279, 12
        %v773 = vpop.permute.xlu0 %772
        %774 = vrot.lane.b32.xlu0 %v280, 12
        %v775 = vpop.permute.xlu0 %774
        %776 = vrot.lane.b32.xlu0 %v281, 12
        %v777 = vpop.permute.xlu0 %776
        %778 = vrot.lane.b32.xlu0 %v282, 12
        %v779 = vpop.permute.xlu0 %778
        %780 = vrot.lane.b32.xlu0 %v283, 12
        %v781 = vpop.permute.xlu0 %780
        %782 = vrot.lane.b32.xlu0 %v284, 12
        %v783 = vpop.permute.xlu0 %782
        %784 = vrot.lane.b32.xlu0 %v285, 12
        %v785 = vpop.permute.xlu0 %784
        %786 = vrot.lane.b32.xlu0 %v286, 12
        %v787 = vpop.permute.xlu0 %786
        %788 = vrot.lane.b32.xlu0 %v287, 12
        %v789 = vpop.permute.xlu0 %788
        %790 = vrot.lane.b32.xlu0 %v288, 12
        %v791 = vpop.permute.xlu0 %790
        %792 = vrot.lane.b32.xlu0 %v289, 12
        %v793 = vpop.permute.xlu0 %792
        %794 = vrot.lane.b32.xlu0 %v290, 12
        %v795 = vpop.permute.xlu0 %794
        %796 = vrot.lane.b32.xlu0 %v291, 12
        %v797 = vpop.permute.xlu0 %796
        %798 = vrot.lane.b32.xlu0 %v292, 12
        %v799 = vpop.permute.xlu0 %798
        %800 = vrot.lane.b32.xlu0 %v293, 12
        %v801 = vpop.permute.xlu0 %800
        %802 = vrot.lane.b32.xlu0 %v294, 12
        %v803 = vpop.permute.xlu0 %802
        %804 = vrot.lane.b32.xlu0 %v295, 12
        %v805 = vpop.permute.xlu0 %804
        %806 = vrot.lane.b32.xlu0 %v296, 12
        %v807 = vpop.permute.xlu0 %806
        %808 = vrot.lane.b32.xlu0 %v297, 12
        %v809 = vpop.permute.xlu0 %808
        %810 = vrot.lane.b32.xlu0 %v298, 12
        %v811 = vpop.permute.xlu0 %810
        %876 = vrot.lane.b32.xlu0 %v299, 16
        %v877 = vpop.permute.xlu0 %876
        %878 = vrot.lane.b32.xlu0 %v300, 16
        %v879 = vpop.permute.xlu0 %878
        %880 = vrot.lane.b32.xlu0 %v301, 16
        %v881 = vpop.permute.xlu0 %880
        %882 = vrot.lane.b32.xlu0 %v302, 16
        %v883 = vpop.permute.xlu0 %882
        %884 = vrot.lane.b32.xlu0 %v303, 16
        %v885 = vpop.permute.xlu0 %884
        %886 = vrot.lane.b32.xlu0 %v304, 16
        %v887 = vpop.permute.xlu0 %886
        %888 = vrot.lane.b32.xlu0 %v305, 16
        %v889 = vpop.permute.xlu0 %888
        %890 = vrot.lane.b32.xlu0 %v306, 16
        %v891 = vpop.permute.xlu0 %890
        %892 = vrot.lane.b32.xlu0 %v307, 16
        %v893 = vpop.permute.xlu0 %892
        %894 = vrot.lane.b32.xlu0 %v308, 16
        %v895 = vpop.permute.xlu0 %894
        %896 = vrot.lane.b32.xlu0 %v309, 16
        %v897 = vpop.permute.xlu0 %896
        %898 = vrot.lane.b32.xlu0 %v310, 16
        %v899 = vpop.permute.xlu0 %898
        %900 = vrot.lane.b32.xlu0 %v311, 16
        %v901 = vpop.permute.xlu0 %900
        %902 = vrot.lane.b32.xlu0 %v312, 16
        %v903 = vpop.permute.xlu0 %902
        %904 = vrot.lane.b32.xlu0 %v313, 16
        %v905 = vpop.permute.xlu0 %904
        %906 = vrot.lane.b32.xlu0 %v314, 16
        %v907 = vpop.permute.xlu0 %906
        %908 = vrot.lane.b32.xlu0 %v315, 16
        %v909 = vpop.permute.xlu0 %908
        %910 = vrot.lane.b32.xlu0 %v316, 16
        %v911 = vpop.permute.xlu0 %910
        %912 = vrot.lane.b32.xlu0 %v317, 16
        %v913 = vpop.permute.xlu0 %912
        %914 = vrot.lane.b32.xlu0 %v318, 16
        %v915 = vpop.permute.xlu0 %914
        %916 = vrot.lane.b32.xlu0 %v319, 16
        %v917 = vpop.permute.xlu0 %916
        %918 = vrot.lane.b32.xlu0 %v320, 16
        %v919 = vpop.permute.xlu0 %918
        %920 = vrot.lane.b32.xlu0 %v321, 16
        %v921 = vpop.permute.xlu0 %920
        %922 = vrot.lane.b32.xlu0 %v322, 16
        %v923 = vpop.permute.xlu0 %922
        %924 = vrot.lane.b32.xlu0 %v323, 16
        %v925 = vpop.permute.xlu0 %924
        %926 = vrot.lane.b32.xlu0 %v324, 16
        %v927 = vpop.permute.xlu0 %926
        %928 = vrot.lane.b32.xlu0 %v325, 16
        %v929 = vpop.permute.xlu0 %928
        %930 = vrot.lane.b32.xlu0 %v326, 16
        %v931 = vpop.permute.xlu0 %930
        %932 = vrot.lane.b32.xlu0 %v327, 16
        %v933 = vpop.permute.xlu0 %932
        %934 = vrot.lane.b32.xlu0 %v328, 16
        %v935 = vpop.permute.xlu0 %934
        %936 = vrot.lane.b32.xlu0 %v329, 16
        %v937 = vpop.permute.xlu0 %936
        %938 = vrot.lane.b32.xlu0 %v330, 16
        %v939 = vpop.permute.xlu0 %938
        %1004 = vrot.lane.b32.xlu0 %v331, 20
        %v1005 = vpop.permute.xlu0 %1004
        %1006 = vrot.lane.b32.xlu0 %v332, 20
        %v1007 = vpop.permute.xlu0 %1006
        %1008 = vrot.lane.b32.xlu0 %v333, 20
        %v1009 = vpop.permute.xlu0 %1008
        %1010 = vrot.lane.b32.xlu0 %v334, 20
        %v1011 = vpop.permute.xlu0 %1010
        %1012 = vrot.lane.b32.xlu0 %v335, 20
        %v1013 = vpop.permute.xlu0 %1012
        %1014 = vrot.lane.b32.xlu0 %v336, 20
        %v1015 = vpop.permute.xlu0 %1014
        %1016 = vrot.lane.b32.xlu0 %v337, 20
        %v1017 = vpop.permute.xlu0 %1016
        %1018 = vrot.lane.b32.xlu0 %v338, 20
        %v1019 = vpop.permute.xlu0 %1018
        %1020 = vrot.lane.b32.xlu0 %v339, 20
        %v1021 = vpop.permute.xlu0 %1020
        %1022 = vrot.lane.b32.xlu0 %v340, 20
        %v1023 = vpop.permute.xlu0 %1022
        %1024 = vrot.lane.b32.xlu0 %v341, 20
        %v1025 = vpop.permute.xlu0 %1024
        %1026 = vrot.lane.b32.xlu0 %v342, 20
        %v1027 = vpop.permute.xlu0 %1026
        %1028 = vrot.lane.b32.xlu0 %v343, 20
        %v1029 = vpop.permute.xlu0 %1028
        %1030 = vrot.lane.b32.xlu0 %v344, 20
        %v1031 = vpop.permute.xlu0 %1030
        %1032 = vrot.lane.b32.xlu0 %v345, 20
        %v1033 = vpop.permute.xlu0 %1032
        %1034 = vrot.lane.b32.xlu0 %v346, 20
        %v1035 = vpop.permute.xlu0 %1034
        %1036 = vrot.lane.b32.xlu0 %v347, 20
        %v1037 = vpop.permute.xlu0 %1036
        %1038 = vrot.lane.b32.xlu0 %v348, 20
        %v1039 = vpop.permute.xlu0 %1038
        %1040 = vrot.lane.b32.xlu0 %v349, 20
        %v1041 = vpop.permute.xlu0 %1040
        %1042 = vrot.lane.b32.xlu0 %v350, 20
        %v1043 = vpop.permute.xlu0 %1042
        %1044 = vrot.lane.b32.xlu0 %v351, 20
        %v1045 = vpop.permute.xlu0 %1044
        %1046 = vrot.lane.b32.xlu0 %v352, 20
        %v1047 = vpop.permute.xlu0 %1046
        %1048 = vrot.lane.b32.xlu0 %v353, 20
        %v1049 = vpop.permute.xlu0 %1048
        %1050 = vrot.lane.b32.xlu0 %v354, 20
        %v1051 = vpop.permute.xlu0 %1050
        %1052 = vrot.lane.b32.xlu0 %v355, 20
        %v1053 = vpop.permute.xlu0 %1052
        %1054 = vrot.lane.b32.xlu0 %v356, 20
        %v1055 = vpop.permute.xlu0 %1054
        %1056 = vrot.lane.b32.xlu0 %v357, 20
        %v1057 = vpop.permute.xlu0 %1056
        %1058 = vrot.lane.b32.xlu0 %v358, 20
        %v1059 = vpop.permute.xlu0 %1058
        %1060 = vrot.lane.b32.xlu0 %v359, 20
        %v1061 = vpop.permute.xlu0 %1060
        %1062 = vrot.lane.b32.xlu0 %v360, 20
        %v1063 = vpop.permute.xlu0 %1062
        %1064 = vrot.lane.b32.xlu0 %v361, 20
        %v1065 = vpop.permute.xlu0 %1064
        %1066 = vrot.lane.b32.xlu0 %v362, 20
        %v1067 = vpop.permute.xlu0 %1066
        %1132 = vrot.lane.b32.xlu0 %v364, 24
        %v1133 = vpop.permute.xlu0 %1132
        %1134 = vrot.lane.b32.xlu0 %v365, 24
        %v1135 = vpop.permute.xlu0 %1134
        %1136 = vrot.lane.b32.xlu0 %v366, 24
        %v1137 = vpop.permute.xlu0 %1136
        %1138 = vrot.lane.b32.xlu0 %v367, 24
        %v1139 = vpop.permute.xlu0 %1138
        %1140 = vrot.lane.b32.xlu0 %v368, 24
        %v1141 = vpop.permute.xlu0 %1140
        %1142 = vrot.lane.b32.xlu0 %v369, 24
        %v1143 = vpop.permute.xlu0 %1142
        %1144 = vrot.lane.b32.xlu0 %v370, 24
        %v1145 = vpop.permute.xlu0 %1144
        %1146 = vrot.lane.b32.xlu0 %v371, 24
        %v1147 = vpop.permute.xlu0 %1146
        %1148 = vrot.lane.b32.xlu0 %v372, 24
        %v1149 = vpop.permute.xlu0 %1148
        %1150 = vrot.lane.b32.xlu0 %v373, 24
        %v1151 = vpop.permute.xlu0 %1150
        %1152 = vrot.lane.b32.xlu0 %v374, 24
        %v1153 = vpop.permute.xlu0 %1152
        %1154 = vrot.lane.b32.xlu0 %v375, 24
        %v1155 = vpop.permute.xlu0 %1154
        %1156 = vrot.lane.b32.xlu0 %v376, 24
        %v1157 = vpop.permute.xlu0 %1156
        %1158 = vrot.lane.b32.xlu0 %v377, 24
        %v1159 = vpop.permute.xlu0 %1158
        %1160 = vrot.lane.b32.xlu0 %v378, 24
        %v1161 = vpop.permute.xlu0 %1160
        %1162 = vrot.lane.b32.xlu0 %v379, 24
        %v1163 = vpop.permute.xlu0 %1162
        %1164 = vrot.lane.b32.xlu0 %v380, 24
        %v1165 = vpop.permute.xlu0 %1164
        %1166 = vrot.lane.b32.xlu0 %v381, 24
        %v1167 = vpop.permute.xlu0 %1166
        %1168 = vrot.lane.b32.xlu0 %v382, 24
        %v1169 = vpop.permute.xlu0 %1168
        %1170 = vrot.lane.b32.xlu0 %v383, 24
        %v1171 = vpop.permute.xlu0 %1170
        %1172 = vrot.lane.b32.xlu0 %v384, 24
        %v1173 = vpop.permute.xlu0 %1172
        %1174 = vrot.lane.b32.xlu0 %v385, 24
        %v1175 = vpop.permute.xlu0 %1174
        %1176 = vrot.lane.b32.xlu0 %v386, 24
        %v1177 = vpop.permute.xlu0 %1176
        %1178 = vrot.lane.b32.xlu0 %v387, 24
        %v1179 = vpop.permute.xlu0 %1178
        %1180 = vrot.lane.b32.xlu0 %v388, 24
        %v1181 = vpop.permute.xlu0 %1180
        %1182 = vrot.lane.b32.xlu0 %v389, 24
        %v1183 = vpop.permute.xlu0 %1182
        %1184 = vrot.lane.b32.xlu0 %v390, 24
        %v1185 = vpop.permute.xlu0 %1184
        %1186 = vrot.lane.b32.xlu0 %v391, 24
        %v1187 = vpop.permute.xlu0 %1186
        %1188 = vrot.lane.b32.xlu0 %v392, 24
        %v1189 = vpop.permute.xlu0 %1188
        %1190 = vrot.lane.b32.xlu0 %v393, 24
        %v1191 = vpop.permute.xlu0 %1190
        %1192 = vrot.lane.b32.xlu0 %v394, 24
        %v1193 = vpop.permute.xlu0 %1192
        %1194 = vrot.lane.b32.xlu0 %v395, 24
        %v1195 = vpop.permute.xlu0 %1194
        %1260 = vrot.lane.b32.xlu0 %v396, 28
        %v1261 = vpop.permute.xlu0 %1260
        %1262 = vrot.lane.b32.xlu0 %v397, 28
        %v1263 = vpop.permute.xlu0 %1262
        %1264 = vrot.lane.b32.xlu0 %v398, 28
        %v1265 = vpop.permute.xlu0 %1264
        %1266 = vrot.lane.b32.xlu0 %v399, 28
        %v1267 = vpop.permute.xlu0 %1266
        %1268 = vrot.lane.b32.xlu0 %v400, 28
        %v1269 = vpop.permute.xlu0 %1268
        %1270 = vrot.lane.b32.xlu0 %v401, 28
        %v1271 = vpop.permute.xlu0 %1270
        %1272 = vrot.lane.b32.xlu0 %v402, 28
        %v1273 = vpop.permute.xlu0 %1272
        %1274 = vrot.lane.b32.xlu0 %v403, 28
        %v1275 = vpop.permute.xlu0 %1274
        %1276 = vrot.lane.b32.xlu0 %v404, 28
        %v1277 = vpop.permute.xlu0 %1276
        %1278 = vrot.lane.b32.xlu0 %v405, 28
        %v1279 = vpop.permute.xlu0 %1278
        %1280 = vrot.lane.b32.xlu0 %v406, 28
        %v1281 = vpop.permute.xlu0 %1280
        %1282 = vrot.lane.b32.xlu0 %v407, 28
        %v1283 = vpop.permute.xlu0 %1282
        %1284 = vrot.lane.b32.xlu0 %v408, 28
        %v1285 = vpop.permute.xlu0 %1284
        %1286 = vrot.lane.b32.xlu0 %v409, 28
        %v1287 = vpop.permute.xlu0 %1286
        %1288 = vrot.lane.b32.xlu0 %v410, 28
        %v1289 = vpop.permute.xlu0 %1288
        %1290 = vrot.lane.b32.xlu0 %v411, 28
        %v1291 = vpop.permute.xlu0 %1290
        %1292 = vrot.lane.b32.xlu0 %v412, 28
        %v1293 = vpop.permute.xlu0 %1292
        %1294 = vrot.lane.b32.xlu0 %v413, 28
        %v1295 = vpop.permute.xlu0 %1294
        %1296 = vrot.lane.b32.xlu0 %v414, 28
        %v1297 = vpop.permute.xlu0 %1296
        %1298 = vrot.lane.b32.xlu0 %v415, 28
        %v1299 = vpop.permute.xlu0 %1298
        %1300 = vrot.lane.b32.xlu0 %v416, 28
        %v1301 = vpop.permute.xlu0 %1300
        %1302 = vrot.lane.b32.xlu0 %v417, 28
        %v1303 = vpop.permute.xlu0 %1302
        %1304 = vrot.lane.b32.xlu0 %v418, 28
        %v1305 = vpop.permute.xlu0 %1304
        %1306 = vrot.lane.b32.xlu0 %v419, 28
        %v1307 = vpop.permute.xlu0 %1306
        %1308 = vrot.lane.b32.xlu0 %v420, 28
        %v1309 = vpop.permute.xlu0 %1308
        %1310 = vrot.lane.b32.xlu0 %v421, 28
        %v1311 = vpop.permute.xlu0 %1310
        %1312 = vrot.lane.b32.xlu0 %v422, 28
        %v1313 = vpop.permute.xlu0 %1312
        %1314 = vrot.lane.b32.xlu0 %v423, 28
        %v1315 = vpop.permute.xlu0 %1314
        %1316 = vrot.lane.b32.xlu0 %v424, 28
        %v1317 = vpop.permute.xlu0 %1316
        %1318 = vrot.lane.b32.xlu0 %v425, 28
        %v1319 = vpop.permute.xlu0 %1318
        %1320 = vrot.lane.b32.xlu0 %v426, 28
        %v1321 = vpop.permute.xlu0 %1320
        %1322 = vrot.lane.b32.xlu0 %v427, 28
        %v1323 = vpop.permute.xlu0 %1322
        %1388 = vrot.lane.b32.xlu0 %v428, 32
        %v1389 = vpop.permute.xlu0 %1388
        %1390 = vrot.lane.b32.xlu0 %v429, 32
        %v1391 = vpop.permute.xlu0 %1390
        %1392 = vrot.lane.b32.xlu0 %v430, 32
        %v1393 = vpop.permute.xlu0 %1392
        %1394 = vrot.lane.b32.xlu0 %v431, 32
        %v1395 = vpop.permute.xlu0 %1394
        %1396 = vrot.lane.b32.xlu0 %v432, 32
        %v1397 = vpop.permute.xlu0 %1396
        %1398 = vrot.lane.b32.xlu0 %v433, 32
        %v1399 = vpop.permute.xlu0 %1398
        %1400 = vrot.lane.b32.xlu0 %v434, 32
        %v1401 = vpop.permute.xlu0 %1400
        %1402 = vrot.lane.b32.xlu0 %v435, 32
        %v1403 = vpop.permute.xlu0 %1402
        %1404 = vrot.lane.b32.xlu0 %v436, 32
        %v1405 = vpop.permute.xlu0 %1404
        %1406 = vrot.lane.b32.xlu0 %v437, 32
        %v1407 = vpop.permute.xlu0 %1406
        %1408 = vrot.lane.b32.xlu0 %v438, 32
        %v1409 = vpop.permute.xlu0 %1408
        %1410 = vrot.lane.b32.xlu0 %v439, 32
        %v1411 = vpop.permute.xlu0 %1410
        %1412 = vrot.lane.b32.xlu0 %v440, 32
        %v1413 = vpop.permute.xlu0 %1412
        %1414 = vrot.lane.b32.xlu0 %v441, 32
        %v1415 = vpop.permute.xlu0 %1414
        %1416 = vrot.lane.b32.xlu0 %v442, 32
        %v1417 = vpop.permute.xlu0 %1416
        %1418 = vrot.lane.b32.xlu0 %v443, 32
        %v1419 = vpop.permute.xlu0 %1418
        %1420 = vrot.lane.b32.xlu0 %v444, 32
        %v1421 = vpop.permute.xlu0 %1420
        %1422 = vrot.lane.b32.xlu0 %v445, 32
        %v1423 = vpop.permute.xlu0 %1422
        %1424 = vrot.lane.b32.xlu0 %v446, 32
        %v1425 = vpop.permute.xlu0 %1424
        %1426 = vrot.lane.b32.xlu0 %v447, 32
        %v1427 = vpop.permute.xlu0 %1426
        %1428 = vrot.lane.b32.xlu0 %v448, 32
        %v1429 = vpop.permute.xlu0 %1428
        %1430 = vrot.lane.b32.xlu0 %v449, 32
        %v1431 = vpop.permute.xlu0 %1430
        %1432 = vrot.lane.b32.xlu0 %v450, 32
        %v1433 = vpop.permute.xlu0 %1432
        %1434 = vrot.lane.b32.xlu0 %v451, 32
        %v1435 = vpop.permute.xlu0 %1434
        %1436 = vrot.lane.b32.xlu0 %v452, 32
        %v1437 = vpop.permute.xlu0 %1436
        %1438 = vrot.lane.b32.xlu0 %v453, 32
        %v1439 = vpop.permute.xlu0 %1438
        %1440 = vrot.lane.b32.xlu0 %v454, 32
        %v1441 = vpop.permute.xlu0 %1440
        %1442 = vrot.lane.b32.xlu0 %v455, 32
        %v1443 = vpop.permute.xlu0 %1442
        %1444 = vrot.lane.b32.xlu0 %v456, 32
        %v1445 = vpop.permute.xlu0 %1444
        %1446 = vrot.lane.b32.xlu0 %v457, 32
        %v1447 = vpop.permute.xlu0 %1446
        %1448 = vrot.lane.b32.xlu0 %v458, 32
        %v1449 = vpop.permute.xlu0 %1448
        %1450 = vrot.lane.b32.xlu0 %v459, 32
        %v1451 = vpop.permute.xlu0 %1450
        %vm1484 = vcmask 31744
        %v1485 = vsel %vm1484, %v170, %v493
        %v1486 = vsel %vm1484, %v171, %v495
        %v1487 = vsel %vm1484, %v172, %v497
        %v1488 = vsel %vm1484, %v173, %v499
        %v1489 = vsel %vm1484, %v174, %v501
        %v1490 = vsel %vm1484, %v175, %v503
        %v1491 = vsel %vm1484, %v176, %v505
        %v1492 = vsel %vm1484, %v177, %v507
        %v1493 = vsel %vm1484, %v178, %v509
        %v1494 = vsel %vm1484, %v179, %v511
        %v1495 = vsel %vm1484, %v180, %v513
        %v1496 = vsel %vm1484, %v181, %v515
        %v1497 = vsel %vm1484, %v182, %v517
        %v1498 = vsel %vm1484, %v183, %v519
        %v1499 = vsel %vm1484, %v184, %v521
        %v1500 = vsel %vm1484, %v185, %v523
        %v1501 = vsel %vm1484, %v186, %v525
        %v1502 = vsel %vm1484, %v187, %v527
        %v1503 = vsel %vm1484, %v188, %v529
        %v1504 = vsel %vm1484, %v189, %v531
        %v1505 = vsel %vm1484, %v190, %v533
        %v1506 = vsel %vm1484, %v191, %v535
        %v1507 = vsel %vm1484, %v192, %v537
        %v1508 = vsel %vm1484, %v193, %v539
        %v1509 = vsel %vm1484, %v194, %v541
        %v1510 = vsel %vm1484, %v195, %v543
        %v1511 = vsel %vm1484, %v196, %v545
        %v1512 = vsel %vm1484, %v197, %v547
        %v1513 = vsel %vm1484, %v198, %v549
        %v1514 = vsel %vm1484, %v199, %v551
        %v1515 = vsel %vm1484, %v200, %v553
        %v1516 = vsel %vm1484, %v201, %v555
        %vm1517 = vcmask 64512
        %v1518 = vsel %vm1517, %v1485, %v621
        %v1519 = vsel %vm1517, %v1486, %v623
        %v1520 = vsel %vm1517, %v1487, %v625
        %v1521 = vsel %vm1517, %v1488, %v627
        %v1522 = vsel %vm1517, %v1489, %v629
        %v1523 = vsel %vm1517, %v1490, %v631
        %v1524 = vsel %vm1517, %v1491, %v633
        %v1525 = vsel %vm1517, %v1492, %v635
        %v1526 = vsel %vm1517, %v1493, %v637
        %v1527 = vsel %vm1517, %v1494, %v639
        %v1528 = vsel %vm1517, %v1495, %v641
        %v1529 = vsel %vm1517, %v1496, %v643
        %v1530 = vsel %vm1517, %v1497, %v645
        %v1531 = vsel %vm1517, %v1498, %v647
        %v1532 = vsel %vm1517, %v1499, %v649
        %v1533 = vsel %vm1517, %v1500, %v651
        %v1534 = vsel %vm1517, %v1501, %v653
        %v1535 = vsel %vm1517, %v1502, %v655
        %v1536 = vsel %vm1517, %v1503, %v657
        %v1537 = vsel %vm1517, %v1504, %v659
        %v1538 = vsel %vm1517, %v1505, %v661
        %v1539 = vsel %vm1517, %v1506, %v663
        %v1540 = vsel %vm1517, %v1507, %v665
        %v1541 = vsel %vm1517, %v1508, %v667
        %v1542 = vsel %vm1517, %v1509, %v669
        %v1543 = vsel %vm1517, %v1510, %v671
        %v1544 = vsel %vm1517, %v1511, %v673
        %v1545 = vsel %vm1517, %v1512, %v675
        %v1546 = vsel %vm1517, %v1513, %v677
        %v1547 = vsel %vm1517, %v1514, %v679
        %v1548 = vsel %vm1517, %v1515, %v681
        %v1549 = vsel %vm1517, %v1516, %v683
        %vm1550 = vcmask 97280
        %v1551 = vsel %vm1550, %v1518, %v749
        %v1552 = vsel %vm1550, %v1519, %v751
        %v1553 = vsel %vm1550, %v1520, %v753
        %v1554 = vsel %vm1550, %v1521, %v755
        %v1555 = vsel %vm1550, %v1522, %v757
        %v1556 = vsel %vm1550, %v1523, %v759
        %v1557 = vsel %vm1550, %v1524, %v761
        %v1558 = vsel %vm1550, %v1525, %v763
        %v1559 = vsel %vm1550, %v1526, %v765
        %v1560 = vsel %vm1550, %v1527, %v767
        %v1561 = vsel %vm1550, %v1528, %v769
        %v1562 = vsel %vm1550, %v1529, %v771
        %v1563 = vsel %vm1550, %v1530, %v773
        %v1564 = vsel %vm1550, %v1531, %v775
        %v1565 = vsel %vm1550, %v1532, %v777
        %v1566 = vsel %vm1550, %v1533, %v779
        %v1567 = vsel %vm1550, %v1534, %v781
        %v1568 = vsel %vm1550, %v1535, %v783
        %v1569 = vsel %vm1550, %v1536, %v785
        %v1570 = vsel %vm1550, %v1537, %v787
        %v1571 = vsel %vm1550, %v1538, %v789
        %v1572 = vsel %vm1550, %v1539, %v791
        %v1573 = vsel %vm1550, %v1540, %v793
        %v1574 = vsel %vm1550, %v1541, %v795
        %v1575 = vsel %vm1550, %v1542, %v797
        %v1576 = vsel %vm1550, %v1543, %v799
        %v1577 = vsel %vm1550, %v1544, %v801
        %v1578 = vsel %vm1550, %v1545, %v803
        %v1579 = vsel %vm1550, %v1546, %v805
        %v1580 = vsel %vm1550, %v1547, %v807
        %v1581 = vsel %vm1550, %v1548, %v809
        %v1582 = vsel %vm1550, %v1549, %v811
        %vm1583 = vcmask 130048
        %v1584 = vsel %vm1583, %v1551, %v877
        %v1585 = vsel %vm1583, %v1552, %v879
        %v1586 = vsel %vm1583, %v1553, %v881
        %v1587 = vsel %vm1583, %v1554, %v883
        %v1588 = vsel %vm1583, %v1555, %v885
        %v1589 = vsel %vm1583, %v1556, %v887
        %v1590 = vsel %vm1583, %v1557, %v889
        %v1591 = vsel %vm1583, %v1558, %v891
        %v1592 = vsel %vm1583, %v1559, %v893
        %v1593 = vsel %vm1583, %v1560, %v895
        %v1594 = vsel %vm1583, %v1561, %v897
        %v1595 = vsel %vm1583, %v1562, %v899
        %v1596 = vsel %vm1583, %v1563, %v901
        %v1597 = vsel %vm1583, %v1564, %v903
        %v1598 = vsel %vm1583, %v1565, %v905
        %v1599 = vsel %vm1583, %v1566, %v907
        %v1600 = vsel %vm1583, %v1567, %v909
        %v1601 = vsel %vm1583, %v1568, %v911
        %v1602 = vsel %vm1583, %v1569, %v913
        %v1603 = vsel %vm1583, %v1570, %v915
        %v1604 = vsel %vm1583, %v1571, %v917
        %v1605 = vsel %vm1583, %v1572, %v919
        %v1606 = vsel %vm1583, %v1573, %v921
        %v1607 = vsel %vm1583, %v1574, %v923
        %v1608 = vsel %vm1583, %v1575, %v925
        %v1609 = vsel %vm1583, %v1576, %v927
        %v1610 = vsel %vm1583, %v1577, %v929
        %v1611 = vsel %vm1583, %v1578, %v931
        %v1612 = vsel %vm1583, %v1579, %v933
        %v1613 = vsel %vm1583, %v1580, %v935
        %v1614 = vsel %vm1583, %v1581, %v937
        %v1615 = vsel %vm1583, %v1582, %v939
        %vm1616 = vcmask 162816
        %v1617 = vsel %vm1616, %v1584, %v1005
        %v1618 = vsel %vm1616, %v1585, %v1007
        %v1619 = vsel %vm1616, %v1586, %v1009
        %v1620 = vsel %vm1616, %v1587, %v1011
        %v1621 = vsel %vm1616, %v1588, %v1013
        %v1622 = vsel %vm1616, %v1589, %v1015
        %v1623 = vsel %vm1616, %v1590, %v1017
        %v1624 = vsel %vm1616, %v1591, %v1019
        %v1625 = vsel %vm1616, %v1592, %v1021
        %v1626 = vsel %vm1616, %v1593, %v1023
        %v1627 = vsel %vm1616, %v1594, %v1025
        %v1628 = vsel %vm1616, %v1595, %v1027
        %v1629 = vsel %vm1616, %v1596, %v1029
        %v1630 = vsel %vm1616, %v1597, %v1031
        %v1631 = vsel %vm1616, %v1598, %v1033
        %v1632 = vsel %vm1616, %v1599, %v1035
        %v1633 = vsel %vm1616, %v1600, %v1037
        %v1634 = vsel %vm1616, %v1601, %v1039
        %v1635 = vsel %vm1616, %v1602, %v1041
        %v1636 = vsel %vm1616, %v1603, %v1043
        %v1637 = vsel %vm1616, %v1604, %v1045
        %v1638 = vsel %vm1616, %v1605, %v1047
        %v1639 = vsel %vm1616, %v1606, %v1049
        %v1640 = vsel %vm1616, %v1607, %v1051
        %v1641 = vsel %vm1616, %v1608, %v1053
        %v1642 = vsel %vm1616, %v1609, %v1055
        %v1643 = vsel %vm1616, %v1610, %v1057
        %v1644 = vsel %vm1616, %v1611, %v1059
        %v1645 = vsel %vm1616, %v1612, %v1061
        %v1646 = vsel %vm1616, %v1613, %v1063
        %v1647 = vsel %vm1616, %v1614, %v1065
        %v1648 = vsel %vm1616, %v1615, %v1067
        %vm1649 = vcmask 195584
        %v1650 = vsel %vm1649, %v1617, %v1133
        %v1651 = vsel %vm1649, %v1618, %v1135
        %v1652 = vsel %vm1649, %v1619, %v1137
        %v1653 = vsel %vm1649, %v1620, %v1139
        %v1654 = vsel %vm1649, %v1621, %v1141
        %v1655 = vsel %vm1649, %v1622, %v1143
        %v1656 = vsel %vm1649, %v1623, %v1145
        %v1657 = vsel %vm1649, %v1624, %v1147
        %v1658 = vsel %vm1649, %v1625, %v1149
        %v1659 = vsel %vm1649, %v1626, %v1151
        %v1660 = vsel %vm1649, %v1627, %v1153
        %v1661 = vsel %vm1649, %v1628, %v1155
        %v1662 = vsel %vm1649, %v1629, %v1157
        %v1663 = vsel %vm1649, %v1630, %v1159
        %v1664 = vsel %vm1649, %v1631, %v1161
        %v1665 = vsel %vm1649, %v1632, %v1163
        %v1666 = vsel %vm1649, %v1633, %v1165
        %v1667 = vsel %vm1649, %v1634, %v1167
        %v1668 = vsel %vm1649, %v1635, %v1169
        %v1669 = vsel %vm1649, %v1636, %v1171
        %v1670 = vsel %vm1649, %v1637, %v1173
        %v1671 = vsel %vm1649, %v1638, %v1175
        %v1672 = vsel %vm1649, %v1639, %v1177
        %v1673 = vsel %vm1649, %v1640, %v1179
        %v1674 = vsel %vm1649, %v1641, %v1181
        %v1675 = vsel %vm1649, %v1642, %v1183
        %v1676 = vsel %vm1649, %v1643, %v1185
        %v1677 = vsel %vm1649, %v1644, %v1187
        %v1678 = vsel %vm1649, %v1645, %v1189
        %v1679 = vsel %vm1649, %v1646, %v1191
        %v1680 = vsel %vm1649, %v1647, %v1193
        %v1681 = vsel %vm1649, %v1648, %v1195
        %vm1682 = vcmask 228352
        %v1683 = vsel %vm1682, %v1650, %v1261
        %v1684 = vsel %vm1682, %v1651, %v1263
        %v1685 = vsel %vm1682, %v1652, %v1265
        %v1686 = vsel %vm1682, %v1653, %v1267
        %v1687 = vsel %vm1682, %v1654, %v1269
        %v1688 = vsel %vm1682, %v1655, %v1271
        %v1689 = vsel %vm1682, %v1656, %v1273
        %v1690 = vsel %vm1682, %v1657, %v1275
        %v1691 = vsel %vm1682, %v1658, %v1277
        %v1692 = vsel %vm1682, %v1659, %v1279
        %v1693 = vsel %vm1682, %v1660, %v1281
        %v1694 = vsel %vm1682, %v1661, %v1283
        %v1695 = vsel %vm1682, %v1662, %v1285
        %v1696 = vsel %vm1682, %v1663, %v1287
        %v1697 = vsel %vm1682, %v1664, %v1289
        %v1698 = vsel %vm1682, %v1665, %v1291
        %v1699 = vsel %vm1682, %v1666, %v1293
        %v1700 = vsel %vm1682, %v1667, %v1295
        %v1701 = vsel %vm1682, %v1668, %v1297
        %v1702 = vsel %vm1682, %v1669, %v1299
        %v1703 = vsel %vm1682, %v1670, %v1301
        %v1704 = vsel %vm1682, %v1671, %v1303
        %v1705 = vsel %vm1682, %v1672, %v1305
        %v1706 = vsel %vm1682, %v1673, %v1307
        %v1707 = vsel %vm1682, %v1674, %v1309
        %v1708 = vsel %vm1682, %v1675, %v1311
        %v1709 = vsel %vm1682, %v1676, %v1313
        %v1710 = vsel %vm1682, %v1677, %v1315
        %v1711 = vsel %vm1682, %v1678, %v1317
        %v1712 = vsel %vm1682, %v1679, %v1319
        %v1713 = vsel %vm1682, %v1680, %v1321
        %v1714 = vsel %vm1682, %v1681, %v1323
        %vm1715 = vcmask 261120
        %v1716 = vsel %vm1715, %v1683, %v1389
        %v1717 = vsel %vm1715, %v1684, %v1391
        %v1718 = vsel %vm1715, %v1685, %v1393
        %v1719 = vsel %vm1715, %v1686, %v1395
        %v1720 = vsel %vm1715, %v1687, %v1397
        %v1721 = vsel %vm1715, %v1688, %v1399
        %v1722 = vsel %vm1715, %v1689, %v1401
        %v1723 = vsel %vm1715, %v1690, %v1403
        %v1724 = vsel %vm1715, %v1691, %v1405
        %v1725 = vsel %vm1715, %v1692, %v1407
        %v1726 = vsel %vm1715, %v1693, %v1409
        %v1727 = vsel %vm1715, %v1694, %v1411
        %v1728 = vsel %vm1715, %v1695, %v1413
        %v1729 = vsel %vm1715, %v1696, %v1415
        %v1730 = vsel %vm1715, %v1697, %v1417
        %v1731 = vsel %vm1715, %v1698, %v1419
        %v1732 = vsel %vm1715, %v1699, %v1421
        %v1733 = vsel %vm1715, %v1700, %v1423
        %v1734 = vsel %vm1715, %v1701, %v1425
        %v1735 = vsel %vm1715, %v1702, %v1427
        %v1736 = vsel %vm1715, %v1703, %v1429
        %v1737 = vsel %vm1715, %v1704, %v1431
        %v1738 = vsel %vm1715, %v1705, %v1433
        %v1739 = vsel %vm1715, %v1706, %v1435
        %v1740 = vsel %vm1715, %v1707, %v1437
        %v1741 = vsel %vm1715, %v1708, %v1439
        %v1742 = vsel %vm1715, %v1709, %v1441
        %v1743 = vsel %vm1715, %v1710, %v1443
        %v1744 = vsel %vm1715, %v1711, %v1445
        %v1745 = vsel %vm1715, %v1712, %v1447
        %v1746 = vsel %vm1715, %v1713, %v1449
        %v1747 = vsel %vm1715, %v1714, %v1451
        %v1748 = vpack.c.bf16 %v1717, %v1716
        %v1749 = vpack.c.bf16 %v1719, %v1718
        %v1750 = vpack.c.bf16 %v1721, %v1720
        %v1751 = vpack.c.bf16 %v1723, %v1722
        %v1752 = vpack.c.bf16 %v1725, %v1724
        %v1753 = vpack.c.bf16 %v1727, %v1726
        %v1754 = vpack.c.bf16 %v1729, %v1728
        %v1755 = vpack.c.bf16 %v1731, %v1730
        %v1756 = vpack.c.bf16 %v1733, %v1732
        %v1757 = vpack.c.bf16 %v1735, %v1734
        %v1758 = vpack.c.bf16 %v1737, %v1736
        %v1759 = vpack.c.bf16 %v1739, %v1738
        %v1760 = vpack.c.bf16 %v1741, %v1740
        %v1761 = vpack.c.bf16 %v1743, %v1742
        %v1762 = vpack.c.bf16 %v1745, %v1744
        %v1763 = vpack.c.bf16 %v1747, %v1746
        %v1764 = vld [vmem:[%s1] sm:$0xff]
        %v1765 = vld [vmem:[%s1 + $0x8] sm:$0xff]
        %v1766 = vld [vmem:[%s1 + $0x10] sm:$0xff]
        %v1767 = vld [vmem:[%s1 + $0x18] sm:$0xff]
        %v1768 = vld [vmem:[%s1 + $0x20] sm:$0xf]
        %v1769 = vpack.c.bf16 %v1765, %v1764
        %v1770 = vpack.c.bf16 %v1767, %v1766
        %v1771 = vpack.c.bf16 %v1768, %v1768
        %v1772 = vld [vmem:[%s2] sm:$0x1]
        %v1774 = vlaneseq
        %v1775 = vshrl.u32 %v1774, 7
        %v1776 = vsub.s32 0, %v1775
        %v1777 = vrot.slane %v1772, %v1776
        %vm1779 = vcmask 293888
        %v1781 = vsel %vm1779, %v1748, 0
        %v1784 = vsel %vm1779, %v1749, 0
        %v1787 = vsel %vm1779, %v1750, 0
        %v1790 = vsel %vm1779, %v1751, 0
        %v1793 = vsel %vm1779, %v1752, 0
        %v1796 = vsel %vm1779, %v1753, 0
        %v1799 = vsel %vm1779, %v1754, 0
        %v1802 = vsel %vm1779, %v1755, 0
        %v1805 = vsel %vm1779, %v1756, 0
        %v1808 = vsel %vm1779, %v1757, 0
        %v1811 = vsel %vm1779, %v1758, 0
        %v1814 = vsel %vm1779, %v1759, 0
        %v1817 = vsel %vm1779, %v1760, 0
        %v1820 = vsel %vm1779, %v1761, 0
        %v1823 = vsel %vm1779, %v1762, 0
        %v1826 = vsel %vm1779, %v1763, 0
        %vm1828 = vcmask 1041408
        %v1830 = vsel %vm1828, %v1771, 0
        %1832 = vmatprep.subr.bf16.mxu0 0
        %1833 = vmatpush1.bf16.msra.mxu0 %v1769
        %1834 = vmatprep.subr.bf16.mxu0 0
        %1835 = vmatpush1.bf16.msra.mxu0 %v1770
        %1836 = vmatprep.subr.bf16.mxu0 0
        %1837 = vmatpush1.bf16.msra.mxu0 %v1830
        %1838 = vmatprep.subr.bf16.mxu0 0
        %1839 = vmatpush1.bf16.msra.mxu0 0
        %1840 = vmatprep.subr.bf16.mxu0 0
        %1841 = vmatpush1.bf16.msra.mxu0 0
        %1842 = vmatprep.subr.bf16.mxu0 0
        %1843 = vmatpush1.bf16.msra.mxu0 0
        %1844 = vmatprep.subr.bf16.mxu0 0
        %1845 = vmatpush1.bf16.msra.mxu0 0
        %1846 = vmatprep.subr.bf16.mxu0 0
        %1847 = vmatpush1.bf16.msra.mxu0 0
        %1848 = vmatprep.subr.bf16.mxu0 0
        %1849 = vmatpush1.bf16.msra.mxu0 0
        %1850 = vmatprep.subr.bf16.mxu0 0
        %1851 = vmatpush1.bf16.msra.mxu0 0
        %1852 = vmatprep.subr.bf16.mxu0 0
        %1853 = vmatpush1.bf16.msra.mxu0 0
        %1854 = vmatprep.subr.bf16.mxu0 0
        %1855 = vmatpush1.bf16.msra.mxu0 0
        %1856 = vmatprep.subr.bf16.mxu0 0
        %1857 = vmatpush1.bf16.msra.mxu0 0
        %1858 = vmatprep.subr.bf16.mxu0 0
        %1859 = vmatpush1.bf16.msra.mxu0 0
        %1860 = vmatprep.subr.bf16.mxu0 0
        %1861 = vmatpush1.bf16.msra.mxu0 0
        %1862 = vmatprep.subr.bf16.mxu0 0
        %1863 = vmatpush1.bf16.msra.mxu0 0
        %1864 = vmatprep.mubr.bf16.mxu0 0
        %1865 = vmatmul.mubr.bf16.gmra.mrb[0].mxu0 %v1781
        %v1866 = vpop.f32.mrb[0].mxu0
        %v1867 = vadd.f32 %v1777, %v1866
        %v1868 = vpop.f32.mrb[0].mxu0
        %v1869 = vpop.f32.mrb[0].mxu0
        %v1870 = vadd.f32 %v1777, %v1869
        %v1871 = vpop.f32.mrb[0].mxu0
        %1872 = vmatprep.mubr.bf16.mxu0 0
        %1873 = vmatmul.mubr.bf16.gmra.mrb[0].mxu0 %v1784
        %v1874 = vpop.f32.mrb[0].mxu0
        %v1875 = vadd.f32 %v1777, %v1874
        %v1876 = vpop.f32.mrb[0].mxu0
        %v1877 = vpop.f32.mrb[0].mxu0
        %v1878 = vadd.f32 %v1777, %v1877
        %v1879 = vpop.f32.mrb[0].mxu0
        %1880 = vmatprep.mubr.bf16.mxu0 0
        %1881 = vmatmul.mubr.bf16.gmra.mrb[0].mxu0 %v1787
        %v1882 = vpop.f32.mrb[0].mxu0
        %v1883 = vadd.f32 %v1777, %v1882
        %v1884 = vpop.f32.mrb[0].mxu0
        %v1885 = vpop.f32.mrb[0].mxu0
        %v1886 = vadd.f32 %v1777, %v1885
        %v1887 = vpop.f32.mrb[0].mxu0
        %1888 = vmatprep.mubr.bf16.mxu0 0
        %1889 = vmatmul.mubr.bf16.gmra.mrb[0].mxu0 %v1790
        %v1890 = vpop.f32.mrb[0].mxu0
        %v1891 = vadd.f32 %v1777, %v1890
        %v1892 = vpop.f32.mrb[0].mxu0
        %v1893 = vpop.f32.mrb[0].mxu0
        %v1894 = vadd.f32 %v1777, %v1893
        %v1895 = vpop.f32.mrb[0].mxu0
        %1896 = vmatprep.mubr.bf16.mxu0 0
        %1897 = vmatmul.mubr.bf16.gmra.mrb[0].mxu0 %v1793
        %v1898 = vpop.f32.mrb[0].mxu0
        %v1899 = vadd.f32 %v1777, %v1898
        %v1900 = vpop.f32.mrb[0].mxu0
        %v1901 = vpop.f32.mrb[0].mxu0
        %v1902 = vadd.f32 %v1777, %v1901
        %v1903 = vpop.f32.mrb[0].mxu0
        %1904 = vmatprep.mubr.bf16.mxu0 0
        %1905 = vmatmul.mubr.bf16.gmra.mrb[0].mxu0 %v1796
        %v1906 = vpop.f32.mrb[0].mxu0
        %v1907 = vadd.f32 %v1777, %v1906
        %v1908 = vpop.f32.mrb[0].mxu0
        %v1909 = vpop.f32.mrb[0].mxu0
        %v1910 = vadd.f32 %v1777, %v1909
        %v1911 = vpop.f32.mrb[0].mxu0
        %1912 = vmatprep.mubr.bf16.mxu0 0
        %1913 = vmatmul.mubr.bf16.gmra.mrb[0].mxu0 %v1799
        %v1914 = vpop.f32.mrb[0].mxu0
        %v1915 = vadd.f32 %v1777, %v1914
        %v1916 = vpop.f32.mrb[0].mxu0
        %v1917 = vpop.f32.mrb[0].mxu0
        %v1918 = vadd.f32 %v1777, %v1917
        %v1919 = vpop.f32.mrb[0].mxu0
        %1920 = vmatprep.mubr.bf16.mxu0 0
        %1921 = vmatmul.mubr.bf16.gmra.mrb[0].mxu0 %v1802
        %v1922 = vpop.f32.mrb[0].mxu0
        %v1923 = vadd.f32 %v1777, %v1922
        %v1924 = vpop.f32.mrb[0].mxu0
        %v1925 = vpop.f32.mrb[0].mxu0
        %v1926 = vadd.f32 %v1777, %v1925
        %v1927 = vpop.f32.mrb[0].mxu0
        %1928 = vmatprep.mubr.bf16.mxu0 0
        %1929 = vmatmul.mubr.bf16.gmra.mrb[0].mxu0 %v1805
        %v1930 = vpop.f32.mrb[0].mxu0
        %v1931 = vadd.f32 %v1777, %v1930
        %v1932 = vpop.f32.mrb[0].mxu0
        %v1933 = vpop.f32.mrb[0].mxu0
        %v1934 = vadd.f32 %v1777, %v1933
        %v1935 = vpop.f32.mrb[0].mxu0
        %1936 = vmatprep.mubr.bf16.mxu0 0
        %1937 = vmatmul.mubr.bf16.gmra.mrb[0].mxu0 %v1808
        %v1938 = vpop.f32.mrb[0].mxu0
        %v1939 = vadd.f32 %v1777, %v1938
        %v1940 = vpop.f32.mrb[0].mxu0
        %v1941 = vpop.f32.mrb[0].mxu0
        %v1942 = vadd.f32 %v1777, %v1941
        %v1943 = vpop.f32.mrb[0].mxu0
        %1944 = vmatprep.mubr.bf16.mxu0 0
        %1945 = vmatmul.mubr.bf16.gmra.mrb[0].mxu0 %v1811
        %v1946 = vpop.f32.mrb[0].mxu0
        %v1947 = vadd.f32 %v1777, %v1946
        %v1948 = vpop.f32.mrb[0].mxu0
        %v1949 = vpop.f32.mrb[0].mxu0
        %v1950 = vadd.f32 %v1777, %v1949
        %v1951 = vpop.f32.mrb[0].mxu0
        %1952 = vmatprep.mubr.bf16.mxu0 0
        %1953 = vmatmul.mubr.bf16.gmra.mrb[0].mxu0 %v1814
        %v1954 = vpop.f32.mrb[0].mxu0
        %v1955 = vadd.f32 %v1777, %v1954
        %v1956 = vpop.f32.mrb[0].mxu0
        %v1957 = vpop.f32.mrb[0].mxu0
        %v1958 = vadd.f32 %v1777, %v1957
        %v1959 = vpop.f32.mrb[0].mxu0
        %1960 = vmatprep.mubr.bf16.mxu0 0
        %1961 = vmatmul.mubr.bf16.gmra.mrb[0].mxu0 %v1817
        %v1962 = vpop.f32.mrb[0].mxu0
        %v1963 = vadd.f32 %v1777, %v1962
        %v1964 = vpop.f32.mrb[0].mxu0
        %v1965 = vpop.f32.mrb[0].mxu0
        %v1966 = vadd.f32 %v1777, %v1965
        %v1967 = vpop.f32.mrb[0].mxu0
        %1968 = vmatprep.mubr.bf16.mxu0 0
        %1969 = vmatmul.mubr.bf16.gmra.mrb[0].mxu0 %v1820
        %v1970 = vpop.f32.mrb[0].mxu0
        %v1971 = vadd.f32 %v1777, %v1970
        %v1972 = vpop.f32.mrb[0].mxu0
        %v1973 = vpop.f32.mrb[0].mxu0
        %v1974 = vadd.f32 %v1777, %v1973
        %v1975 = vpop.f32.mrb[0].mxu0
        %1976 = vmatprep.mubr.bf16.mxu0 0
        %1977 = vmatmul.mubr.bf16.gmra.mrb[0].mxu0 %v1823
        %v1978 = vpop.f32.mrb[0].mxu0
        %v1979 = vadd.f32 %v1777, %v1978
        %v1980 = vpop.f32.mrb[0].mxu0
        %v1981 = vpop.f32.mrb[0].mxu0
        %v1982 = vadd.f32 %v1777, %v1981
        %v1983 = vpop.f32.mrb[0].mxu0
        %1984 = vmatprep.mubr.bf16.mxu0 0
        %1985 = vmatmul.mubr.bf16.gmra.mrb[0].mxu0 %v1826
        %v1986 = vpop.f32.mrb[0].mxu0
        %v1987 = vadd.f32 %v1777, %v1986
        %v1988 = vpop.f32.mrb[0].mxu0
        %v1989 = vpop.f32.mrb[0].mxu0
        %v1990 = vadd.f32 %v1777, %v1989
        %v1991 = vpop.f32.mrb[0].mxu0
        %1992 = vdwg.mxu0
        %v1993 = vmax.f32 %v1867, 0.0
        %v1994 = vmax.f32 %v1870, 0.0
        %v1995 = vmax.f32 %v1875, 0.0
        %v1996 = vmax.f32 %v1878, 0.0
        %v1997 = vmax.f32 %v1883, 0.0
        %v1998 = vmax.f32 %v1886, 0.0
        %v1999 = vmax.f32 %v1891, 0.0
        %v2000 = vmax.f32 %v1894, 0.0
        %v2001 = vmax.f32 %v1899, 0.0
        %v2002 = vmax.f32 %v1902, 0.0
        %v2003 = vmax.f32 %v1907, 0.0
        %v2004 = vmax.f32 %v1910, 0.0
        %v2005 = vmax.f32 %v1915, 0.0
        %v2006 = vmax.f32 %v1918, 0.0
        %v2007 = vmax.f32 %v1923, 0.0
        %v2008 = vmax.f32 %v1926, 0.0
        %v2009 = vmax.f32 %v1931, 0.0
        %v2010 = vmax.f32 %v1934, 0.0
        %v2011 = vmax.f32 %v1939, 0.0
        %v2012 = vmax.f32 %v1942, 0.0
        %v2013 = vmax.f32 %v1947, 0.0
        %v2014 = vmax.f32 %v1950, 0.0
        %v2015 = vmax.f32 %v1955, 0.0
        %v2016 = vmax.f32 %v1958, 0.0
        %v2017 = vmax.f32 %v1963, 0.0
        %v2018 = vmax.f32 %v1966, 0.0
        %v2019 = vmax.f32 %v1971, 0.0
        %v2020 = vmax.f32 %v1974, 0.0
        %v2021 = vmax.f32 %v1979, 0.0
        %v2022 = vmax.f32 %v1982, 0.0
        %v2023 = vmax.f32 %v1987, 0.0
        %v2024 = vmax.f32 %v1990, 0.0
        %2025 = vst [vmem:[%s163] sm:$0xff] %v1993
        %2026 = vst [vmem:[%s163 + $0x8] sm:$0xff] %v1994
        %2027 = vst [vmem:[%s163 + $0x10] sm:$0xff] %v1995
        %2028 = vst [vmem:[%s163 + $0x18] sm:$0xff] %v1996
        %2029 = vst [vmem:[%s163 + $0x20] sm:$0xff] %v1997
        %2030 = vst [vmem:[%s163 + $0x28] sm:$0xff] %v1998
        %2031 = vst [vmem:[%s163 + $0x30] sm:$0xff] %v1999
        %2032 = vst [vmem:[%s163 + $0x38] sm:$0xff] %v2000
        %2033 = vst [vmem:[%s163 + $0x40] sm:$0xff] %v2001
        %2034 = vst [vmem:[%s163 + $0x48] sm:$0xff] %v2002
        %2035 = vst [vmem:[%s163 + $0x50] sm:$0xff] %v2003
        %2036 = vst [vmem:[%s163 + $0x58] sm:$0xff] %v2004
        %2037 = vst [vmem:[%s163 + $0x60] sm:$0xff] %v2005
        %2038 = vst [vmem:[%s163 + $0x68] sm:$0xff] %v2006
        %2039 = vst [vmem:[%s163 + $0x70] sm:$0xff] %v2007
        %2040 = vst [vmem:[%s163 + $0x78] sm:$0xff] %v2008
        %2041 = vst [vmem:[%s163 + $0x80] sm:$0xff] %v2009
        %2042 = vst [vmem:[%s163 + $0x88] sm:$0xff] %v2010
        %2043 = vst [vmem:[%s163 + $0x90] sm:$0xff] %v2011
        %2044 = vst [vmem:[%s163 + $0x98] sm:$0xff] %v2012
        %2045 = vst [vmem:[%s163 + $0xa0] sm:$0xff] %v2013
        %2046 = vst [vmem:[%s163 + $0xa8] sm:$0xff] %v2014
        %2047 = vst [vmem:[%s163 + $0xb0] sm:$0xff] %v2015
        %2048 = vst [vmem:[%s163 + $0xb8] sm:$0xff] %v2016
        %2049 = vst [vmem:[%s163 + $0xc0] sm:$0xff] %v2017
        %2050 = vst [vmem:[%s163 + $0xc8] sm:$0xff] %v2018
        %2051 = vst [vmem:[%s163 + $0xd0] sm:$0xff] %v2019
        %2052 = vst [vmem:[%s163 + $0xd8] sm:$0xff] %v2020
        %2053 = vst [vmem:[%s163 + $0xe0] sm:$0xff] %v2021
        %2054 = vst [vmem:[%s163 + $0xe8] sm:$0xff] %v2022
        %2055 = vst [vmem:[%s163 + $0xf0] sm:$0xff] %v2023
        %2056 = vst [vmem:[%s163 + $0xf8] sm:$0xff] %v2024
        %s2057 = sand.u32 %s93, 1
        %s2058 = scalar_lea.sflag [#allocation3], %s2057
        %s2059 = sand.u32 %s93, 1
        %s2060 = smul.addr %s2059, 256
        %s2061 = scalar_lea.vmem [#allocation2], %s2060
        // Predicated region
        $region33: #{tpu_custom_call.1} parent=31 // pred_check
          %p2062 = pneg %p103
        $region34: #{tpu_custom_call.1} parent=31 // pred_check_branch
          %2064 = sbr.rel (%p2062) target = $region36
        $region35: #{tpu_custom_call.1} parent=31 // pred_region
          %s2066 = ssub.s32 4096, 4096
          %2067 = vsyncadd %s2058, %s2066
          %s2068 = smul.addr %s17, 32
          %s2069 = smul.addr %s2068, 128
          %s2070 = scalar_lea.hbm %s3, %s2069
          %s2071 = sshll.u32 %s2061, 4
          %s2072 = int_to_ptr.vmem [resolvable:$true] %s2071
          %2077 = dma.vmem_to_hbm [thread:$0]  %s2072, 4096, %s2070, %s2058, 128, 128, 8
        $region36: #{tpu_custom_call.1} parent=31 // pred_fallthru
          _
      $region32: #{tpu_custom_call.1} parent=5 // pred_fallthru
        _
      %p2078 = scmp.le.s32.totalorder 2, %s12
      // Predicated region
      $region37: #{tpu_custom_call.1} parent=5 // pred_check
        %p2079 = pneg %p2078
      $region38: #{tpu_custom_call.1} parent=5 // pred_check_branch
        %2081 = sbr.rel (%p2079) target = $region40
      $region39: #{tpu_custom_call.1} parent=5 // pred_region
        %s2082 = ssub.s32 %s12, 2
        // Predicated region
        $region41: #{tpu_custom_call.1} parent=39 // pred_check
          %p2083 = pneg %p109
        $region42: #{tpu_custom_call.1} parent=39 // pred_check_branch
          %2085 = sbr.rel (%p2083) target = $region44
        $region43: #{tpu_custom_call.1} parent=39 // pred_region
          %s2086 = sand.u32 %s94, 1
          %s2087 = scalar_lea.sflag [#allocation3], %s2086
          %s2088 = sand.u32 %s94, 1
          %s2089 = smul.addr %s2088, 256
          %s2090 = scalar_lea.vmem [#allocation2], %s2089
          %2091 = dma.done %s2087, 4096
        $region44: #{tpu_custom_call.1} parent=39 // pred_fallthru
          _
      $region40: #{tpu_custom_call.1} parent=5 // pred_fallthru
        _
    $region6: #{tpu_custom_call.1} parent=1 // loop_footer
      %s16 = sadd.s32 1, %s12
    $region7: #{tpu_custom_call.1} parent=1 // loop_footer_branch
      %11 = sbr.rel target = $region3
    $region8: #{tpu_custom_call.1} parent=1 // loop_exit
      _
    %2092 = vsyncpa [#allocation3], 1
    %s2093 = scalar_lea.sflag [#allocation3], 1
    %2094 = vsyncpa %s2093, 1

</llo_original>
